<compile_context>
chip_gen: v7x
topology: tpu7x:2x2x1
jax: 0.10.0
libtpu: 0.0.40
codegen_flags: <defaults>
</compile_context>

<pallas_src>
import functools

import numpy as np
import jax
import jax.numpy as jnp
from jax.experimental import pallas as pl
from jax.experimental.pallas import tpu as pltpu


# ----------------------- fused LSTM recurrence + MLP head -----------------------
def lstm_mlp_kernel(blkmax_ref, len_ref, xg_ref, whh_ref, w1_ref, b1_ref,
                    w2_ref, b2_ref, out_ref, h_ref, c_ref, hbuf_ref,
                    *, t_chunk, bb, hidden):
    H = hidden
    ib = pl.program_id(0)              # batch block
    it = pl.program_id(1)              # time chunk ("arbitrary": h/c carried)

    @pl.when(it == 0)
    def _init():
        h_ref[...] = jnp.zeros_like(h_ref)
        c_ref[...] = jnp.zeros_like(c_ref)

    t0 = it * t_chunk
    max_len = blkmax_ref[ib]           # SMEM scalar (scalar prefetch)
    lens = len_ref[...]                # (bb, 1) int32, for the per-row mask
    whh = whh_ref[...]                 # (H, 4H), grid-invariant

    # Whole chunk past every sequence's end: skip the recurrence entirely and
    # just zero the h_out buffer (the head below then reproduces PyTorch's
    # Linear-applied-to-pad_packed-zeros behaviour).
    @pl.when(t0 >= max_len)
    def _skip():
        hbuf_ref[...] = jnp.zeros_like(hbuf_ref)

    @pl.when(t0 < max_len)
    def _recurrence():
        def step(t, carry):
            h, c = carry
            row = pl.multiple_of(t * bb, bb)          # bb is a multiple of 8
            # Only the recurrent projection is on the serial path; the
            # x-projection (xg) was precomputed for all timesteps outside.
            g = xg_ref[pl.ds(row, bb), :] + jnp.dot(
                h, whh, preferred_element_type=jnp.float32)       # (bb, 4H)
            # Gate order i, f, g, o (PyTorch). sigmoid(x) = 0.5*tanh(0.5x)+0.5
            # -> one EUP push per gate instead of exp + reciprocal.
            i_g = 0.5 * jnp.tanh(0.5 * g[:, 0 * H:1 * H]) + 0.5
            f_g = 0.5 * jnp.tanh(0.5 * g[:, 1 * H:2 * H]) + 0.5
            g_g = jnp.tanh(g[:, 2 * H:3 * H])
            o_g = 0.5 * jnp.tanh(0.5 * g[:, 3 * H:4 * H]) + 0.5

            c_new = f_g * c + i_g * g_g
            h_new = o_g * jnp.tanh(c_new)

            # Packed-sequence semantics: freeze state past each row's length,
            # emit zeros there (pad_packed_sequence padding_value=0).
            alive = lens > (t0 + t)                    # (bb, 1)
            h = jnp.where(alive, h_new, h)
            c = jnp.where(alive, c_new, c)
            hbuf_ref[pl.ds(row, bb), :] = jnp.where(alive, h_new, 0.0)
            return h, c

        h, c = jax.lax.fori_loop(0, t_chunk, step, (h_ref[...], c_ref[...]),
                                 unroll=min(4, t_chunk))   # bounded unroll
        h_ref[...] = h
        c_ref[...] = c

    # Hoisted MLP head: ONE batched matmul over the whole chunk, off the serial
    # path.  PyTorch applies the Linear head to the zero-padded rows too.
    hb = hbuf_ref[...]                                          # (t_chunk*bb, H)
    h1 = jnp.maximum(
        jnp.dot(hb, w1_ref[...], preferred_element_type=jnp.float32) + b1_ref[...],
        0.0)
    out_ref[...] = (jnp.dot(h1, w2_ref[...], preferred_element_type=jnp.float32)
                    + b2_ref[...]).astype(out_ref.dtype)


def run_lstm_mlp(blk_max, lens_blk, xg, whh, w1, b1, w2, b2,
                 *, t_chunk, nt, bb, nb):
    H, G = whh.shape
    O = w2.shape[1]
    kernel = functools.partial(lstm_mlp_kernel, t_chunk=t_chunk, bb=bb, hidden=H)
    return pl.pallas_call(
        kernel,
        out_shape=jax.ShapeDtypeStruct((nb, nt * t_chunk * bb, O), jnp.float32),
        grid_spec=pltpu.PrefetchScalarGridSpec(
            num_scalar_prefetch=1,                  # blk_max -> SMEM
            grid=(nb, nt),
            in_specs=[
                pl.BlockSpec((None, bb, 1), lambda ib, it, bm: (ib, 0, 0)),   # lens
                pl.BlockSpec((None, t_chunk * bb, G),
                             lambda ib, it, bm: (ib, it, 0)),                 # xg chunk
                pl.BlockSpec((H, G), lambda ib, it, bm: (0, 0)),              # W_hh
                pl.BlockSpec((H, H), lambda ib, it, bm: (0, 0)),              # W1
                pl.BlockSpec((1, H), lambda ib, it, bm: (0, 0)),              # b1
                pl.BlockSpec((H, O), lambda ib, it, bm: (0, 0)),              # W2
                pl.BlockSpec((1, O), lambda ib, it, bm: (0, 0)),              # b2
            ],
            out_specs=pl.BlockSpec((None, t_chunk * bb, O),
                                   lambda ib, it, bm: (ib, it, 0)),
            scratch_shapes=[
                pltpu.VMEM((bb, H), jnp.float32),              # h carry
                pltpu.VMEM((bb, H), jnp.float32),              # c carry
                pltpu.VMEM((t_chunk * bb, H), jnp.float32),    # h_out chunk buffer
            ],
        ),
        compiler_params=pltpu.CompilerParams(
            dimension_semantics=("parallel", "arbitrary")),
    )(blk_max, lens_blk, xg, whh, w1, b1, w2, b2)


# -------------------------------- full forward --------------------------------
def lstm_model_forward(params, inputs, input_lengths_np, *, t_chunk=128):
    """inputs: (B, T) int32 token ids; input_lengths_np: host numpy ints (B,)."""
    B, _ = inputs.shape
    H = params["w_hh"].shape[0]
    O = params["w2"].shape[1]
    # NOTE: t_out baked in as a Python int -> a new max(lengths) recompiles.
    t_out = int(np.max(input_lengths_np))

    nb = 1                                       # TODO(synk): nb=2 on v7x (2 TCs)
    bb = max(8, -(-B // 8) * 8)                  # batch rows, sublane-aligned
    Bp = nb * bb
    tc = min(t_out, t_chunk)
    nt = -(-t_out // tc)
    t_pad = nt * tc

    # Hoisted, time-independent work (one big XLA matmul): embedding lookup +
    # x @ W_ih + (b_ih + b_hh), produced time-major at natural gate width 4H.
    emb = jnp.take(params["embedding"], inputs[:, :t_out], axis=0)       # (B,T,E)
    xg = jnp.einsum("bte,eg->tbg", emb, params["w_ih"]) + params["b"]    # (T,B,4H)
    xg = jnp.pad(xg, ((0, t_pad - t_out), (0, Bp - B), (0, 0)))
    # rows ordered (t, b): row = t*bb + b_local -> all in-kernel slices 8-aligned
    xg = xg.reshape(t_pad, nb, bb, 4 * H).transpose(1, 0, 2, 3)
    xg = xg.reshape(nb, t_pad * bb, 4 * H)

    lens = np.zeros((Bp,), np.int32)
    lens[:B] = np.asarray(input_lengths_np, np.int32)
    lens_blk = jnp.asarray(lens.reshape(nb, bb, 1))
    blk_max = jnp.asarray(lens.reshape(nb, bb).max(axis=1).astype(np.int32))

    out = run_lstm_mlp(blk_max, lens_blk, xg, params["w_hh"], params["w1"],
                       params["b1"], params["w2"], params["b2"],
                       t_chunk=tc, nt=nt, bb=bb, nb=nb)   # (nb, t_pad*bb, O)

    out = out.reshape(nb, t_pad, bb, O).transpose(0, 2, 1, 3).reshape(Bp, t_pad, O)
    return out[:B, :t_out]                                  # (B, max_len, O)


# ------------------------------ pure-JAX reference ------------------------------
def lstm_model_reference(params, inputs, input_lengths_np):
    t_out = int(np.max(input_lengths_np))
    B = inputs.shape[0]
    H = params["w_hh"].shape[0]
    emb = jnp.take(params["embedding"], inputs[:, :t_out], axis=0)
    lens = jnp.asarray(np.asarray(input_lengths_np, np.int32))[:, None]

    def step(carry, x_t):
        h, c, t = carry
        g = x_t @ params["w_ih"] + h @ params["w_hh"] + params["b"]
        i = jax.nn.sigmoid(g[:, :H]); f = jax.nn.sigmoid(g[:, H:2 * H])
        gg = jnp.tanh(g[:, 2 * H:3 * H]); o = jax.nn.sigmoid(g[:, 3 * H:])
        c_new = f * c + i * gg
        h_new = o * jnp.tanh(c_new)
        alive = lens > t
        h = jnp.where(alive, h_new, h)
        c = jnp.where(alive, c_new, c)
        return (h, c, t + 1), jnp.where(alive, h_new, 0.0)

    init = (jnp.zeros((B, H), jnp.float32), jnp.zeros((B, H), jnp.float32), 0)
    _, outs = jax.lax.scan(step, init, jnp.swapaxes(emb, 0, 1))
    outs = jnp.swapaxes(outs, 0, 1)                         # (B, t_out, H)
    h1 = jnp.maximum(outs @ params["w1"] + params["b1"], 0.0)
    return h1 @ params["w2"] + params["b2"]


def init_params(key, vocab_size, embedding_dim, hidden_dim, output_dim):
    E, H, O = embedding_dim, hidden_dim, output_dim
    ks = jax.random.split(key, 8)
    scale = 0.1
    return {
        "embedding": scale * jax.random.normal(ks[0], (vocab_size, E), jnp.float32),
        # LSTM weights transposed vs PyTorch: (in, 4H) / (H, 4H); gate order i,f,g,o.
        "w_ih": scale * jax.random.normal(ks[1], (E, 4 * H), jnp.float32),
        "w_hh": scale * jax.random.normal(ks[2], (H, 4 * H), jnp.float32),
        # b = b_ih + b_hh combined (when porting real PyTorch weights, sum them).
        "b":    scale * jax.random.normal(ks[3], (1, 4 * H), jnp.float32),
        "w1":   scale * jax.random.normal(ks[4], (H, H), jnp.float32),
        "b1":   scale * jax.random.normal(ks[5], (1, H), jnp.float32),
        "w2":   scale * jax.random.normal(ks[6], (H, O), jnp.float32),
        "b2":   scale * jax.random.normal(ks[7], (1, O), jnp.float32),
    }


if __name__ == "__main__":
    vocab_size, embedding_dim, hidden_dim, output_dim = 50, 16, 32, 4
    B, T = 2, 8

    key = jax.random.PRNGKey(0)
    pkey, ikey = jax.random.split(key)
    params = init_params(pkey, vocab_size, embedding_dim, hidden_dim, output_dim)

    inputs = jax.random.randint(ikey, (B, T), 0, vocab_size, dtype=jnp.int32)
    input_lengths = np.array([8, 5], dtype=np.int32)   # host-side, like PyTorch

    # t_chunk=4 exercises the carried-state time-chunk pipeline (2 chunks).
    out = lstm_model_forward(params, inputs, input_lengths, t_chunk=4)
    jax.block_until_ready(out)
    assert out.shape == (B, int(input_lengths.max()), output_dim)

    ref = lstm_model_reference(params, inputs, input_lengths)
    np.testing.assert_allclose(np.asarray(out), np.asarray(ref),
                               rtol=5e-2, atol=5e-3)
    print("KERNEL_OK")
</pallas_src>

<mosaic_0001>
module attributes {stable_mosaic.version = 11 : i64} {
  func.func @lstm_mlp_kernel(%arg0: i32, %arg1: i32, %arg2: memref<1xi32, #tpu.memory_space<smem>>, %arg3: memref<1x8x1xi32, #tpu.memory_space<vmem>>, %arg4: memref<1x32x128xf32, #tpu.memory_space<vmem>>, %arg5: memref<32x128xf32, #tpu.memory_space<vmem>>, %arg6: memref<32x32xf32, #tpu.memory_space<vmem>>, %arg7: memref<1x32xf32, #tpu.memory_space<vmem>>, %arg8: memref<32x4xf32, #tpu.memory_space<vmem>>, %arg9: memref<1x4xf32, #tpu.memory_space<vmem>>, %arg10: memref<1x32x4xf32, #tpu.memory_space<vmem>>, %arg11: memref<8x32xf32, #tpu.memory_space<vmem>>, %arg12: memref<8x32xf32, #tpu.memory_space<vmem>>, %arg13: memref<32x32xf32, #tpu.memory_space<vmem>>) attributes {dimension_semantics = [#tpu.dimension_semantics<parallel>, #tpu.dimension_semantics<arbitrary>], iteration_bounds = array<i64: 1, 2>, scalar_prefetch = 1 : i64, scratch_operands = 3 : i64, tpu.core_type = #tpu.core_type<tc>, window_params = [{transform_indices = @transform_0, window_bounds = array<i64: 1, 8, 1>}, {transform_indices = @transform_1, window_bounds = array<i64: 1, 32, 128>}, {pipeline_mode = #tpu.pipeline_mode<synchronous>, transform_indices = @transform_2, window_bounds = array<i64: 32, 128>}, {pipeline_mode = #tpu.pipeline_mode<synchronous>, transform_indices = @transform_3, window_bounds = array<i64: 32, 32>}, {pipeline_mode = #tpu.pipeline_mode<synchronous>, transform_indices = @transform_4, window_bounds = array<i64: 1, 32>}, {pipeline_mode = #tpu.pipeline_mode<synchronous>, transform_indices = @transform_5, window_bounds = array<i64: 32, 4>}, {pipeline_mode = #tpu.pipeline_mode<synchronous>, transform_indices = @transform_6, window_bounds = array<i64: 1, 4>}, {transform_indices = @transform_7, window_bounds = array<i64: 1, 32, 4>}]} {
    %c0_i32 = arith.constant 0 : i32
    %0 = arith.cmpi eq, %arg1, %c0_i32 : i32
    %1 = arith.extui %0 : i1 to i32
    %c0_i32_0 = arith.constant 0 : i32
    %2 = arith.cmpi ne, %1, %c0_i32_0 : i32
    scf.if %2 {
      %cst_22 = arith.constant 0.000000e+00 : f32
      %31 = vector.broadcast %cst_22 : f32 to vector<8x32xf32>
      %c0_23 = arith.constant 0 : index
      %c0_24 = arith.constant 0 : index
      %32 = vector.load %arg11[%c0_23, %c0_24] : memref<8x32xf32, #tpu.memory_space<vmem>>, vector<8x32xf32>
      tpu.vector_store %arg11[%c0_23, %c0_24], %31 {strides = array<i32>} : memref<8x32xf32, #tpu.memory_space<vmem>>, vector<8x32xf32>,
      %cst_25 = arith.constant 0.000000e+00 : f32
      %33 = vector.broadcast %cst_25 : f32 to vector<8x32xf32>
      %c0_26 = arith.constant 0 : index
      %c0_27 = arith.constant 0 : index
      %34 = vector.load %arg12[%c0_26, %c0_27] : memref<8x32xf32, #tpu.memory_space<vmem>>, vector<8x32xf32>
      tpu.vector_store %arg12[%c0_26, %c0_27], %33 {strides = array<i32>} : memref<8x32xf32, #tpu.memory_space<vmem>>, vector<8x32xf32>,
    } else {
    }
    %c4_i32 = arith.constant 4 : i32
    %3 = arith.muli %arg1, %c4_i32 : i32
    %4 = arith.index_cast %arg0 : i32 to index
    %5 = memref.load %arg2[%4] : memref<1xi32, #tpu.memory_space<smem>>
    %c0 = arith.constant 0 : index
    %c0_1 = arith.constant 0 : index
    %c0_2 = arith.constant 0 : index
    %6 = vector.load %arg3[%c0, %c0_1, %c0_2] : memref<1x8x1xi32, #tpu.memory_space<vmem>>, vector<1x8x1xi32>
    %7 = vector.shape_cast %6 : vector<1x8x1xi32> to vector<8x1xi32>
    %c0_3 = arith.constant 0 : index
    %c0_4 = arith.constant 0 : index
    %8 = vector.load %arg5[%c0_3, %c0_4] : memref<32x128xf32, #tpu.memory_space<vmem>>, vector<32x128xf32>
    %9 = arith.cmpi sge, %3, %5 : i32
    %10 = arith.extui %9 : i1 to i32
    %c0_i32_5 = arith.constant 0 : i32
    %11 = arith.cmpi ne, %10, %c0_i32_5 : i32
    scf.if %11 {
      %cst_22 = arith.constant 0.000000e+00 : f32
      %31 = vector.broadcast %cst_22 : f32 to vector<32x32xf32>
      %c0_23 = arith.constant 0 : index
      %c0_24 = arith.constant 0 : index
      %32 = vector.load %arg13[%c0_23, %c0_24] : memref<32x32xf32, #tpu.memory_space<vmem>>, vector<32x32xf32>
      tpu.vector_store %arg13[%c0_23, %c0_24], %31 {strides = array<i32>} : memref<32x32xf32, #tpu.memory_space<vmem>>, vector<32x32xf32>,
    } else {
    }
    %12 = arith.cmpi slt, %3, %5 : i32
    %13 = arith.extui %12 : i1 to i32
    %c0_i32_6 = arith.constant 0 : i32
    %14 = arith.cmpi ne, %13, %c0_i32_6 : i32
    scf.if %14 {
      %c0_22 = arith.constant 0 : index
      %c0_23 = arith.constant 0 : index
      %31 = vector.load %arg11[%c0_22, %c0_23] : memref<8x32xf32, #tpu.memory_space<vmem>>, vector<8x32xf32>
      %c0_24 = arith.constant 0 : index
      %c0_25 = arith.constant 0 : index
      %32 = vector.load %arg12[%c0_24, %c0_25] : memref<8x32xf32, #tpu.memory_space<vmem>>, vector<8x32xf32>
      %c0_i32_26 = arith.constant 0 : i32
      %c8_i32 = arith.constant 8 : i32
      %33 = arith.muli %c0_i32_26, %c8_i32 : i32
      %34 = tpu.assume_multiple %33, 8 : i32
      %c0_27 = arith.constant 0 : index
      %35 = arith.index_cast %34 : i32 to index
      %c0_28 = arith.constant 0 : index
      %36 = vector.load %arg4[%c0_27, %35, %c0_28] : memref<1x32x128xf32, #tpu.memory_space<vmem>>, vector<1x8x128xf32>
      %37 = vector.shape_cast %36 : vector<1x8x128xf32> to vector<8x128xf32>
      %cst_29 = arith.constant dense<0.000000e+00> : vector<8x128xf32>
      %38 = tpu.matmul %31, %8, %cst_29 {dimension_numbers = #tpu.dot_dimension_numbers<[1], [0], [0], [1], [0, 0, 1, 1], [], []>} : vector<8x32xf32>, vector<32x128xf32>, vector<8x128xf32> -> vector<8x128xf32>
      %39 = arith.addf %37, %38 : vector<8x128xf32>
      %40 = vector.extract_strided_slice %39 {offsets = [0, 0], sizes = [8, 32], strides = [1, 1]} : vector<8x128xf32> to vector<8x32xf32>
      %cst_30 = arith.constant 5.000000e-01 : f32
      %41 = vector.broadcast %cst_30 : f32 to vector<8x32xf32>
      %42 = arith.mulf %41, %40 : vector<8x32xf32>
      %43 = math.tanh %42 : vector<8x32xf32>
      %cst_31 = arith.constant 5.000000e-01 : f32
      %44 = vector.broadcast %cst_31 : f32 to vector<8x32xf32>
      %45 = arith.mulf %44, %43 : vector<8x32xf32>
      %cst_32 = arith.constant 5.000000e-01 : f32
      %46 = vector.broadcast %cst_32 : f32 to vector<8x32xf32>
      %47 = arith.addf %45, %46 : vector<8x32xf32>
      %48 = vector.extract_strided_slice %39 {offsets = [0, 32], sizes = [8, 32], strides = [1, 1]} : vector<8x128xf32> to vector<8x32xf32>
      %cst_33 = arith.constant 5.000000e-01 : f32
      %49 = vector.broadcast %cst_33 : f32 to vector<8x32xf32>
      %50 = arith.mulf %49, %48 : vector<8x32xf32>
      %51 = math.tanh %50 : vector<8x32xf32>
      %cst_34 = arith.constant 5.000000e-01 : f32
      %52 = vector.broadcast %cst_34 : f32 to vector<8x32xf32>
      %53 = arith.mulf %52, %51 : vector<8x32xf32>
      %cst_35 = arith.constant 5.000000e-01 : f32
      %54 = vector.broadcast %cst_35 : f32 to vector<8x32xf32>
      %55 = arith.addf %53, %54 : vector<8x32xf32>
      %56 = vector.extract_strided_slice %39 {offsets = [0, 64], sizes = [8, 32], strides = [1, 1]} : vector<8x128xf32> to vector<8x32xf32>
      %57 = math.tanh %56 : vector<8x32xf32>
      %58 = vector.extract_strided_slice %39 {offsets = [0, 96], sizes = [8, 32], strides = [1, 1]} : vector<8x128xf32> to vector<8x32xf32>
      %cst_36 = arith.constant 5.000000e-01 : f32
      %59 = vector.broadcast %cst_36 : f32 to vector<8x32xf32>
      %60 = arith.mulf %59, %58 : vector<8x32xf32>
      %61 = math.tanh %60 : vector<8x32xf32>
      %cst_37 = arith.constant 5.000000e-01 : f32
      %62 = vector.broadcast %cst_37 : f32 to vector<8x32xf32>
      %63 = arith.mulf %62, %61 : vector<8x32xf32>
      %cst_38 = arith.constant 5.000000e-01 : f32
      %64 = vector.broadcast %cst_38 : f32 to vector<8x32xf32>
      %65 = arith.addf %63, %64 : vector<8x32xf32>
      %66 = arith.mulf %55, %32 : vector<8x32xf32>
      %67 = arith.mulf %47, %57 : vector<8x32xf32>
      %68 = arith.addf %66, %67 : vector<8x32xf32>
      %69 = math.tanh %68 : vector<8x32xf32>
      %70 = arith.mulf %65, %69 : vector<8x32xf32>
      %71 = arith.addi %3, %c0_i32_26 : i32
      %72 = vector.broadcast %71 : i32 to vector<8x1xi32>
      %73 = arith.cmpi sgt, %7, %72 : vector<8x1xi32>
      %74 = vector.shape_cast %73 : vector<8x1xi1> to vector<8x1xi1>
      %75 = vector.broadcast %74 : vector<8x1xi1> to vector<8x32xi1>
      %76 = arith.select %75, %70, %31 : vector<8x32xi1>, vector<8x32xf32>
      %77 = vector.shape_cast %73 : vector<8x1xi1> to vector<8x1xi1>
      %78 = vector.broadcast %77 : vector<8x1xi1> to vector<8x32xi1>
      %79 = arith.select %78, %68, %32 : vector<8x32xi1>, vector<8x32xf32>
      %cst_39 = arith.constant 0.000000e+00 : f32
      %80 = vector.shape_cast %73 : vector<8x1xi1> to vector<8x1xi1>
      %81 = vector.broadcast %80 : vector<8x1xi1> to vector<8x32xi1>
      %82 = vector.broadcast %cst_39 : f32 to vector<8x32xf32>
      %83 = arith.select %81, %70, %82 : vector<8x32xi1>, vector<8x32xf32>
      %84 = arith.index_cast %34 : i32 to index
      %c0_40 = arith.constant 0 : index
      %85 = vector.load %arg13[%84, %c0_40] : memref<32x32xf32, #tpu.memory_space<vmem>>, vector<8x32xf32>
      tpu.vector_store %arg13[%84, %c0_40], %83 {strides = array<i32>} : memref<32x32xf32, #tpu.memory_space<vmem>>, vector<8x32xf32>,
      %c1_i32 = arith.constant 1 : i32
      %c8_i32_41 = arith.constant 8 : i32
      %86 = arith.muli %c1_i32, %c8_i32_41 : i32
      %87 = tpu.assume_multiple %86, 8 : i32
      %c0_42 = arith.constant 0 : index
      %88 = arith.index_cast %87 : i32 to index
      %c0_43 = arith.constant 0 : index
      %89 = vector.load %arg4[%c0_42, %88, %c0_43] : memref<1x32x128xf32, #tpu.memory_space<vmem>>, vector<1x8x128xf32>
      %90 = vector.shape_cast %89 : vector<1x8x128xf32> to vector<8x128xf32>
      %cst_44 = arith.constant dense<0.000000e+00> : vector<8x128xf32>
      %91 = tpu.matmul %76, %8, %cst_44 {dimension_numbers = #tpu.dot_dimension_numbers<[1], [0], [0], [1], [0, 0, 1, 1], [], []>} : vector<8x32xf32>, vector<32x128xf32>, vector<8x128xf32> -> vector<8x128xf32>
      %92 = arith.addf %90, %91 : vector<8x128xf32>
      %93 = vector.extract_strided_slice %92 {offsets = [0, 0], sizes = [8, 32], strides = [1, 1]} : vector<8x128xf32> to vector<8x32xf32>
      %cst_45 = arith.constant 5.000000e-01 : f32
      %94 = vector.broadcast %cst_45 : f32 to vector<8x32xf32>
      %95 = arith.mulf %94, %93 : vector<8x32xf32>
      %96 = math.tanh %95 : vector<8x32xf32>
      %cst_46 = arith.constant 5.000000e-01 : f32
      %97 = vector.broadcast %cst_46 : f32 to vector<8x32xf32>
      %98 = arith.mulf %97, %96 : vector<8x32xf32>
      %cst_47 = arith.constant 5.000000e-01 : f32
      %99 = vector.broadcast %cst_47 : f32 to vector<8x32xf32>
      %100 = arith.addf %98, %99 : vector<8x32xf32>
      %101 = vector.extract_strided_slice %92 {offsets = [0, 32], sizes = [8, 32], strides = [1, 1]} : vector<8x128xf32> to vector<8x32xf32>
      %cst_48 = arith.constant 5.000000e-01 : f32
      %102 = vector.broadcast %cst_48 : f32 to vector<8x32xf32>
      %103 = arith.mulf %102, %101 : vector<8x32xf32>
      %104 = math.tanh %103 : vector<8x32xf32>
      %cst_49 = arith.constant 5.000000e-01 : f32
      %105 = vector.broadcast %cst_49 : f32 to vector<8x32xf32>
      %106 = arith.mulf %105, %104 : vector<8x32xf32>
      %cst_50 = arith.constant 5.000000e-01 : f32
      %107 = vector.broadcast %cst_50 : f32 to vector<8x32xf32>
      %108 = arith.addf %106, %107 : vector<8x32xf32>
      %109 = vector.extract_strided_slice %92 {offsets = [0, 64], sizes = [8, 32], strides = [1, 1]} : vector<8x128xf32> to vector<8x32xf32>
      %110 = math.tanh %109 : vector<8x32xf32>
      %111 = vector.extract_strided_slice %92 {offsets = [0, 96], sizes = [8, 32], strides = [1, 1]} : vector<8x128xf32> to vector<8x32xf32>
      %cst_51 = arith.constant 5.000000e-01 : f32
      %112 = vector.broadcast %cst_51 : f32 to vector<8x32xf32>
      %113 = arith.mulf %112, %111 : vector<8x32xf32>
      %114 = math.tanh %113 : vector<8x32xf32>
      %cst_52 = arith.constant 5.000000e-01 : f32
      %115 = vector.broadcast %cst_52 : f32 to vector<8x32xf32>
      %116 = arith.mulf %115, %114 : vector<8x32xf32>
      %cst_53 = arith.constant 5.000000e-01 : f32
      %117 = vector.broadcast %cst_53 : f32 to vector<8x32xf32>
      %118 = arith.addf %116, %117 : vector<8x32xf32>
      %119 = arith.mulf %108, %79 : vector<8x32xf32>
      %120 = arith.mulf %100, %110 : vector<8x32xf32>
      %121 = arith.addf %119, %120 : vector<8x32xf32>
      %122 = math.tanh %121 : vector<8x32xf32>
      %123 = arith.mulf %118, %122 : vector<8x32xf32>
      %124 = arith.addi %3, %c1_i32 : i32
      %125 = vector.broadcast %124 : i32 to vector<8x1xi32>
      %126 = arith.cmpi sgt, %7, %125 : vector<8x1xi32>
      %127 = vector.shape_cast %126 : vector<8x1xi1> to vector<8x1xi1>
      %128 = vector.broadcast %127 : vector<8x1xi1> to vector<8x32xi1>
      %129 = arith.select %128, %123, %76 : vector<8x32xi1>, vector<8x32xf32>
      %130 = vector.shape_cast %126 : vector<8x1xi1> to vector<8x1xi1>
      %131 = vector.broadcast %130 : vector<8x1xi1> to vector<8x32xi1>
      %132 = arith.select %131, %121, %79 : vector<8x32xi1>, vector<8x32xf32>
      %cst_54 = arith.constant 0.000000e+00 : f32
      %133 = vector.shape_cast %126 : vector<8x1xi1> to vector<8x1xi1>
      %134 = vector.broadcast %133 : vector<8x1xi1> to vector<8x32xi1>
      %135 = vector.broadcast %cst_54 : f32 to vector<8x32xf32>
      %136 = arith.select %134, %123, %135 : vector<8x32xi1>, vector<8x32xf32>
      %137 = arith.index_cast %87 : i32 to index
      %c0_55 = arith.constant 0 : index
      %138 = vector.load %arg13[%137, %c0_55] : memref<32x32xf32, #tpu.memory_space<vmem>>, vector<8x32xf32>
      tpu.vector_store %arg13[%137, %c0_55], %136 {strides = array<i32>} : memref<32x32xf32, #tpu.memory_space<vmem>>, vector<8x32xf32>,
      %c2_i32 = arith.constant 2 : i32
      %c8_i32_56 = arith.constant 8 : i32
      %139 = arith.muli %c2_i32, %c8_i32_56 : i32
      %140 = tpu.assume_multiple %139, 8 : i32
      %c0_57 = arith.constant 0 : index
      %141 = arith.index_cast %140 : i32 to index
      %c0_58 = arith.constant 0 : index
      %142 = vector.load %arg4[%c0_57, %141, %c0_58] : memref<1x32x128xf32, #tpu.memory_space<vmem>>, vector<1x8x128xf32>
      %143 = vector.shape_cast %142 : vector<1x8x128xf32> to vector<8x128xf32>
      %cst_59 = arith.constant dense<0.000000e+00> : vector<8x128xf32>
      %144 = tpu.matmul %129, %8, %cst_59 {dimension_numbers = #tpu.dot_dimension_numbers<[1], [0], [0], [1], [0, 0, 1, 1], [], []>} : vector<8x32xf32>, vector<32x128xf32>, vector<8x128xf32> -> vector<8x128xf32>
      %145 = arith.addf %143, %144 : vector<8x128xf32>
      %146 = vector.extract_strided_slice %145 {offsets = [0, 0], sizes = [8, 32], strides = [1, 1]} : vector<8x128xf32> to vector<8x32xf32>
      %cst_60 = arith.constant 5.000000e-01 : f32
      %147 = vector.broadcast %cst_60 : f32 to vector<8x32xf32>
      %148 = arith.mulf %147, %146 : vector<8x32xf32>
      %149 = math.tanh %148 : vector<8x32xf32>
      %cst_61 = arith.constant 5.000000e-01 : f32
      %150 = vector.broadcast %cst_61 : f32 to vector<8x32xf32>
      %151 = arith.mulf %150, %149 : vector<8x32xf32>
      %cst_62 = arith.constant 5.000000e-01 : f32
      %152 = vector.broadcast %cst_62 : f32 to vector<8x32xf32>
      %153 = arith.addf %151, %152 : vector<8x32xf32>
      %154 = vector.extract_strided_slice %145 {offsets = [0, 32], sizes = [8, 32], strides = [1, 1]} : vector<8x128xf32> to vector<8x32xf32>
      %cst_63 = arith.constant 5.000000e-01 : f32
      %155 = vector.broadcast %cst_63 : f32 to vector<8x32xf32>
      %156 = arith.mulf %155, %154 : vector<8x32xf32>
      %157 = math.tanh %156 : vector<8x32xf32>
      %cst_64 = arith.constant 5.000000e-01 : f32
      %158 = vector.broadcast %cst_64 : f32 to vector<8x32xf32>
      %159 = arith.mulf %158, %157 : vector<8x32xf32>
      %cst_65 = arith.constant 5.000000e-01 : f32
      %160 = vector.broadcast %cst_65 : f32 to vector<8x32xf32>
      %161 = arith.addf %159, %160 : vector<8x32xf32>
      %162 = vector.extract_strided_slice %145 {offsets = [0, 64], sizes = [8, 32], strides = [1, 1]} : vector<8x128xf32> to vector<8x32xf32>
      %163 = math.tanh %162 : vector<8x32xf32>
      %164 = vector.extract_strided_slice %145 {offsets = [0, 96], sizes = [8, 32], strides = [1, 1]} : vector<8x128xf32> to vector<8x32xf32>
      %cst_66 = arith.constant 5.000000e-01 : f32
      %165 = vector.broadcast %cst_66 : f32 to vector<8x32xf32>
      %166 = arith.mulf %165, %164 : vector<8x32xf32>
      %167 = math.tanh %166 : vector<8x32xf32>
      %cst_67 = arith.constant 5.000000e-01 : f32
      %168 = vector.broadcast %cst_67 : f32 to vector<8x32xf32>
      %169 = arith.mulf %168, %167 : vector<8x32xf32>
      %cst_68 = arith.constant 5.000000e-01 : f32
      %170 = vector.broadcast %cst_68 : f32 to vector<8x32xf32>
      %171 = arith.addf %169, %170 : vector<8x32xf32>
      %172 = arith.mulf %161, %132 : vector<8x32xf32>
      %173 = arith.mulf %153, %163 : vector<8x32xf32>
      %174 = arith.addf %172, %173 : vector<8x32xf32>
      %175 = math.tanh %174 : vector<8x32xf32>
      %176 = arith.mulf %171, %175 : vector<8x32xf32>
      %177 = arith.addi %3, %c2_i32 : i32
      %178 = vector.broadcast %177 : i32 to vector<8x1xi32>
      %179 = arith.cmpi sgt, %7, %178 : vector<8x1xi32>
      %180 = vector.shape_cast %179 : vector<8x1xi1> to vector<8x1xi1>
      %181 = vector.broadcast %180 : vector<8x1xi1> to vector<8x32xi1>
      %182 = arith.select %181, %176, %129 : vector<8x32xi1>, vector<8x32xf32>
      %183 = vector.shape_cast %179 : vector<8x1xi1> to vector<8x1xi1>
      %184 = vector.broadcast %183 : vector<8x1xi1> to vector<8x32xi1>
      %185 = arith.select %184, %174, %132 : vector<8x32xi1>, vector<8x32xf32>
      %cst_69 = arith.constant 0.000000e+00 : f32
      %186 = vector.shape_cast %179 : vector<8x1xi1> to vector<8x1xi1>
      %187 = vector.broadcast %186 : vector<8x1xi1> to vector<8x32xi1>
      %188 = vector.broadcast %cst_69 : f32 to vector<8x32xf32>
      %189 = arith.select %187, %176, %188 : vector<8x32xi1>, vector<8x32xf32>
      %190 = arith.index_cast %140 : i32 to index
      %c0_70 = arith.constant 0 : index
      %191 = vector.load %arg13[%190, %c0_70] : memref<32x32xf32, #tpu.memory_space<vmem>>, vector<8x32xf32>
      tpu.vector_store %arg13[%190, %c0_70], %189 {strides = array<i32>} : memref<32x32xf32, #tpu.memory_space<vmem>>, vector<8x32xf32>,
      %c3_i32 = arith.constant 3 : i32
      %c8_i32_71 = arith.constant 8 : i32
      %192 = arith.muli %c3_i32, %c8_i32_71 : i32
      %193 = tpu.assume_multiple %192, 8 : i32
      %c0_72 = arith.constant 0 : index
      %194 = arith.index_cast %193 : i32 to index
      %c0_73 = arith.constant 0 : index
      %195 = vector.load %arg4[%c0_72, %194, %c0_73] : memref<1x32x128xf32, #tpu.memory_space<vmem>>, vector<1x8x128xf32>
      %196 = vector.shape_cast %195 : vector<1x8x128xf32> to vector<8x128xf32>
      %cst_74 = arith.constant dense<0.000000e+00> : vector<8x128xf32>
      %197 = tpu.matmul %182, %8, %cst_74 {dimension_numbers = #tpu.dot_dimension_numbers<[1], [0], [0], [1], [0, 0, 1, 1], [], []>} : vector<8x32xf32>, vector<32x128xf32>, vector<8x128xf32> -> vector<8x128xf32>
      %198 = arith.addf %196, %197 : vector<8x128xf32>
      %199 = vector.extract_strided_slice %198 {offsets = [0, 0], sizes = [8, 32], strides = [1, 1]} : vector<8x128xf32> to vector<8x32xf32>
      %cst_75 = arith.constant 5.000000e-01 : f32
      %200 = vector.broadcast %cst_75 : f32 to vector<8x32xf32>
      %201 = arith.mulf %200, %199 : vector<8x32xf32>
      %202 = math.tanh %201 : vector<8x32xf32>
      %cst_76 = arith.constant 5.000000e-01 : f32
      %203 = vector.broadcast %cst_76 : f32 to vector<8x32xf32>
      %204 = arith.mulf %203, %202 : vector<8x32xf32>
      %cst_77 = arith.constant 5.000000e-01 : f32
      %205 = vector.broadcast %cst_77 : f32 to vector<8x32xf32>
      %206 = arith.addf %204, %205 : vector<8x32xf32>
      %207 = vector.extract_strided_slice %198 {offsets = [0, 32], sizes = [8, 32], strides = [1, 1]} : vector<8x128xf32> to vector<8x32xf32>
      %cst_78 = arith.constant 5.000000e-01 : f32
      %208 = vector.broadcast %cst_78 : f32 to vector<8x32xf32>
      %209 = arith.mulf %208, %207 : vector<8x32xf32>
      %210 = math.tanh %209 : vector<8x32xf32>
      %cst_79 = arith.constant 5.000000e-01 : f32
      %211 = vector.broadcast %cst_79 : f32 to vector<8x32xf32>
      %212 = arith.mulf %211, %210 : vector<8x32xf32>
      %cst_80 = arith.constant 5.000000e-01 : f32
      %213 = vector.broadcast %cst_80 : f32 to vector<8x32xf32>
      %214 = arith.addf %212, %213 : vector<8x32xf32>
      %215 = vector.extract_strided_slice %198 {offsets = [0, 64], sizes = [8, 32], strides = [1, 1]} : vector<8x128xf32> to vector<8x32xf32>
      %216 = math.tanh %215 : vector<8x32xf32>
      %217 = vector.extract_strided_slice %198 {offsets = [0, 96], sizes = [8, 32], strides = [1, 1]} : vector<8x128xf32> to vector<8x32xf32>
      %cst_81 = arith.constant 5.000000e-01 : f32
      %218 = vector.broadcast %cst_81 : f32 to vector<8x32xf32>
      %219 = arith.mulf %218, %217 : vector<8x32xf32>
      %220 = math.tanh %219 : vector<8x32xf32>
      %cst_82 = arith.constant 5.000000e-01 : f32
      %221 = vector.broadcast %cst_82 : f32 to vector<8x32xf32>
      %222 = arith.mulf %221, %220 : vector<8x32xf32>
      %cst_83 = arith.constant 5.000000e-01 : f32
      %223 = vector.broadcast %cst_83 : f32 to vector<8x32xf32>
      %224 = arith.addf %222, %223 : vector<8x32xf32>
      %225 = arith.mulf %214, %185 : vector<8x32xf32>
      %226 = arith.mulf %206, %216 : vector<8x32xf32>
      %227 = arith.addf %225, %226 : vector<8x32xf32>
      %228 = math.tanh %227 : vector<8x32xf32>
      %229 = arith.mulf %224, %228 : vector<8x32xf32>
      %230 = arith.addi %3, %c3_i32 : i32
      %231 = vector.broadcast %230 : i32 to vector<8x1xi32>
      %232 = arith.cmpi sgt, %7, %231 : vector<8x1xi32>
      %233 = vector.shape_cast %232 : vector<8x1xi1> to vector<8x1xi1>
      %234 = vector.broadcast %233 : vector<8x1xi1> to vector<8x32xi1>
      %235 = arith.select %234, %229, %182 : vector<8x32xi1>, vector<8x32xf32>
      %236 = vector.shape_cast %232 : vector<8x1xi1> to vector<8x1xi1>
      %237 = vector.broadcast %236 : vector<8x1xi1> to vector<8x32xi1>
      %238 = arith.select %237, %227, %185 : vector<8x32xi1>, vector<8x32xf32>
      %cst_84 = arith.constant 0.000000e+00 : f32
      %239 = vector.shape_cast %232 : vector<8x1xi1> to vector<8x1xi1>
      %240 = vector.broadcast %239 : vector<8x1xi1> to vector<8x32xi1>
      %241 = vector.broadcast %cst_84 : f32 to vector<8x32xf32>
      %242 = arith.select %240, %229, %241 : vector<8x32xi1>, vector<8x32xf32>
      %243 = arith.index_cast %193 : i32 to index
      %c0_85 = arith.constant 0 : index
      %244 = vector.load %arg13[%243, %c0_85] : memref<32x32xf32, #tpu.memory_space<vmem>>, vector<8x32xf32>
      tpu.vector_store %arg13[%243, %c0_85], %242 {strides = array<i32>} : memref<32x32xf32, #tpu.memory_space<vmem>>, vector<8x32xf32>,
      %c4_i32_86 = arith.constant 4 : i32
      %c0_87 = arith.constant 0 : index
      %c0_88 = arith.constant 0 : index
      %245 = vector.load %arg11[%c0_87, %c0_88] : memref<8x32xf32, #tpu.memory_space<vmem>>, vector<8x32xf32>
      tpu.vector_store %arg11[%c0_87, %c0_88], %235 {strides = array<i32>} : memref<8x32xf32, #tpu.memory_space<vmem>>, vector<8x32xf32>,
      %c0_89 = arith.constant 0 : index
      %c0_90 = arith.constant 0 : index
      %246 = vector.load %arg12[%c0_89, %c0_90] : memref<8x32xf32, #tpu.memory_space<vmem>>, vector<8x32xf32>
      tpu.vector_store %arg12[%c0_89, %c0_90], %238 {strides = array<i32>} : memref<8x32xf32, #tpu.memory_space<vmem>>, vector<8x32xf32>,
    } else {
    }
    %c0_7 = arith.constant 0 : index
    %c0_8 = arith.constant 0 : index
    %15 = vector.load %arg13[%c0_7, %c0_8] : memref<32x32xf32, #tpu.memory_space<vmem>>, vector<32x32xf32>
    %c0_9 = arith.constant 0 : index
    %c0_10 = arith.constant 0 : index
    %16 = vector.load %arg6[%c0_9, %c0_10] : memref<32x32xf32, #tpu.memory_space<vmem>>, vector<32x32xf32>
    %cst = arith.constant dense<0.000000e+00> : vector<32x32xf32>
    %17 = tpu.matmul %15, %16, %cst {dimension_numbers = #tpu.dot_dimension_numbers<[1], [0], [0], [1], [0, 0, 1, 1], [], []>} : vector<32x32xf32>, vector<32x32xf32>, vector<32x32xf32> -> vector<32x32xf32>
    %c0_11 = arith.constant 0 : index
    %c0_12 = arith.constant 0 : index
    %18 = vector.load %arg7[%c0_11, %c0_12] : memref<1x32xf32, #tpu.memory_space<vmem>>, vector<1x32xf32>
    %19 = vector.broadcast %18 : vector<1x32xf32> to vector<32x32xf32>
    %20 = arith.addf %17, %19 : vector<32x32xf32>
    %cst_13 = arith.constant 0.000000e+00 : f32
    %21 = vector.broadcast %cst_13 : f32 to vector<32x32xf32>
    %22 = arith.maximumf %20, %21 : vector<32x32xf32>
    %c0_14 = arith.constant 0 : index
    %c0_15 = arith.constant 0 : index
    %23 = vector.load %arg8[%c0_14, %c0_15] : memref<32x4xf32, #tpu.memory_space<vmem>>, vector<32x4xf32>
    %cst_16 = arith.constant dense<0.000000e+00> : vector<32x4xf32>
    %24 = tpu.matmul %22, %23, %cst_16 {dimension_numbers = #tpu.dot_dimension_numbers<[1], [0], [0], [1], [0, 0, 1, 1], [], []>} : vector<32x32xf32>, vector<32x4xf32>, vector<32x4xf32> -> vector<32x4xf32>
    %c0_17 = arith.constant 0 : index
    %c0_18 = arith.constant 0 : index
    %25 = vector.load %arg9[%c0_17, %c0_18] : memref<1x4xf32, #tpu.memory_space<vmem>>, vector<1x4xf32>
    %26 = vector.broadcast %25 : vector<1x4xf32> to vector<32x4xf32>
    %27 = arith.addf %24, %26 : vector<32x4xf32>
    %c0_19 = arith.constant 0 : index
    %c0_20 = arith.constant 0 : index
    %c0_21 = arith.constant 0 : index
    %28 = vector.load %arg10[%c0_19, %c0_20, %c0_21] : memref<1x32x4xf32, #tpu.memory_space<vmem>>, vector<1x32x4xf32>
    %29 = vector.shape_cast %28 : vector<1x32x4xf32> to vector<32x4xf32>
    %30 = vector.shape_cast %27 : vector<32x4xf32> to vector<1x32x4xf32>
    tpu.vector_store %arg10[%c0_19, %c0_20, %c0_21], %30 {strides = array<i32>} : memref<1x32x4xf32, #tpu.memory_space<vmem>>, vector<1x32x4xf32>,
    return
  }
  func.func @transform_0(%arg0: i32, %arg1: i32, %arg2: memref<1xi32, #tpu.memory_space<smem>>) -> (i32, i32, i32) {
    %c0_i32 = arith.constant 0 : i32
    %c0_i32_0 = arith.constant 0 : i32
    %c0_i32_1 = arith.constant 0 : i32
    return %arg0, %c0_i32, %c0_i32_0 : i32, i32, i32
  }
  func.func @transform_1(%arg0: i32, %arg1: i32, %arg2: memref<1xi32, #tpu.memory_space<smem>>) -> (i32, i32, i32) {
    %c0_i32 = arith.constant 0 : i32
    %c0_i32_0 = arith.constant 0 : i32
    return %arg0, %arg1, %c0_i32 : i32, i32, i32
  }
  func.func @transform_2(%arg0: i32, %arg1: i32, %arg2: memref<1xi32, #tpu.memory_space<smem>>) -> (i32, i32) {
    %c0_i32 = arith.constant 0 : i32
    %c0_i32_0 = arith.constant 0 : i32
    %c0_i32_1 = arith.constant 0 : i32
    return %c0_i32, %c0_i32_0 : i32, i32
  }
  func.func @transform_3(%arg0: i32, %arg1: i32, %arg2: memref<1xi32, #tpu.memory_space<smem>>) -> (i32, i32) {
    %c0_i32 = arith.constant 0 : i32
    %c0_i32_0 = arith.constant 0 : i32
    %c0_i32_1 = arith.constant 0 : i32
    return %c0_i32, %c0_i32_0 : i32, i32
  }
  func.func @transform_4(%arg0: i32, %arg1: i32, %arg2: memref<1xi32, #tpu.memory_space<smem>>) -> (i32, i32) {
    %c0_i32 = arith.constant 0 : i32
    %c0_i32_0 = arith.constant 0 : i32
    %c0_i32_1 = arith.constant 0 : i32
    return %c0_i32, %c0_i32_0 : i32, i32
  }
  func.func @transform_5(%arg0: i32, %arg1: i32, %arg2: memref<1xi32, #tpu.memory_space<smem>>) -> (i32, i32) {
    %c0_i32 = arith.constant 0 : i32
    %c0_i32_0 = arith.constant 0 : i32
    %c0_i32_1 = arith.constant 0 : i32
    return %c0_i32, %c0_i32_0 : i32, i32
  }
  func.func @transform_6(%arg0: i32, %arg1: i32, %arg2: memref<1xi32, #tpu.memory_space<smem>>) -> (i32, i32) {
    %c0_i32 = arith.constant 0 : i32
    %c0_i32_0 = arith.constant 0 : i32
    %c0_i32_1 = arith.constant 0 : i32
    return %c0_i32, %c0_i32_0 : i32, i32
  }
  func.func @transform_7(%arg0: i32, %arg1: i32, %arg2: memref<1xi32, #tpu.memory_space<smem>>) -> (i32, i32, i32) {
    %c0_i32 = arith.constant 0 : i32
    %c0_i32_0 = arith.constant 0 : i32
    return %arg0, %arg1, %c0_i32 : i32, i32, i32
  }
}

</mosaic_0001>

<llo_original>
// kernel: tpu_custom_call.1
$region0: #{tpu_custom_call.1}
  #allocation0 [shape = 'u32[]', space=smem, size = 0x4, offset = 0x4, fixed_abs, tag = 'smem constant byte address 0x4 - core index']
  #allocation1 [shape = 'u32[144,128]{1,0:T(1,128)}', space=vmem, size = 0x12000, scoped, tag = 'internal scratch']
  #allocation2 [shape = 'f32[8,32]{1,0:T(8,128)}', space=vmem, size = 0x1000, scoped, tag = 'scratch operand']
  #allocation3 [shape = 'f32[8,32]{1,0:T(8,128)}', space=vmem, size = 0x1000, scoped, tag = 'scratch operand']
  #allocation4 [shape = 'f32[32,32]{1,0:T(8,128)}', space=vmem, size = 0x4000, scoped, tag = 'scratch operand']
  #allocation5 [shape = 's32[1]{0}', space=sflag, size = 0x4, scoped, tag = 'scoped memory for tpu_custom_call.1']
  #allocation6 [shape = 's32[1]{0:T(128)S(6)}', space=smem, size = 0x200, scoped, tag = 'prefetched SMEM operand 0']
  %s0 = inlined_call_operand.<no memory space> [shape: s32[1], index: 0, kind: input, shape index: {}]
  %s1 = inlined_call_operand.vmem [shape: s32[1,8,1], index: 1, kind: input, shape index: {}]
  %s2 = inlined_call_operand.hbm [shape: f32[1,64,128], index: 2, kind: input, shape index: {}]
  %s3 = inlined_call_operand.vmem [shape: f32[32,128], index: 3, kind: input, shape index: {}]
  %s4 = inlined_call_operand.hbm [shape: f32[32,32], index: 4, kind: input, shape index: {}]
  %s5 = inlined_call_operand.vmem [shape: f32[1,32], index: 5, kind: input, shape index: {}]
  %s6 = inlined_call_operand.vmem [shape: f32[32,4], index: 6, kind: input, shape index: {}]
  %s7 = inlined_call_operand.vmem [shape: f32[1,4], index: 7, kind: input, shape index: {}]
  %s8 = inlined_call_operand.vmem [shape: f32[1,64,4], index: 8, kind: output, shape index: {}]
  %s9 = sld [smem:[#allocation0]]
  $region81: #{tpu_custom_call.1} parent=0
    _
  %s11 = ssub.s32 1, %s9
  %s12 = scalar_select 0, %s11, %s9
  %13 = sst [smem:[#allocation6]] %s0
  $region1: #{tpu_custom_call.1} parent=0
    #allocation7 [shape = 'u8[32768]{0}', space=vmem, size = 0x8000, scoped, tag = 'input window, operand 2']
    #allocation8 [shape = 's32[2]{0}', space=sflag, size = 0x8, scoped, tag = 'scoped memory for tpu_custom_call.1']
    #allocation9 [shape = 'u8[16384]{0}', space=vmem, size = 0x4000, scoped, tag = 'input window, operand 4, single buffered']
    #allocation10 [shape = 's32[1]{0}', space=sflag, size = 0x4, scoped, tag = 'scoped memory for tpu_custom_call.1']
    %14 = vsyncpa [#allocation8], 0
    %s15 = scalar_lea.sflag [#allocation8], 1
    %16 = vsyncpa %s15, 0
    %17 = vsyncpa [#allocation10], 0
    loop: start=0, step=1, limit=4
    $region2: #{tpu_custom_call.1} parent=1 // loop_pre_header
      _
    $region3: #{tpu_custom_call.1} parent=1 // loop_header
      %s19 = sphi 0, %s23
      %p20 = scmp.ge.s32.totalorder %s19, 4
      %s26 = sphi 0, %s38
      %s27 = sphi 0, %s34
      %s28 = sphi 0, %s26
      %s29 = sphi 0, %s27
      %s30 = sphi 0, %s28
      %s31 = sphi 0, %s29
      %s41 = sphi 0, %s43
      %s44 = sphi 0, %s41
      %s45 = sphi 0, %s44
      %s61 = sphi 0, %s45
      %s69 = sphi 0, %s71
      %s72 = sphi 0, %s69
      %s73 = sphi 0, %s72
      %s89 = sphi 0, %s73
      %s93 = sphi 0, %s93
      %s95 = sphi 0, %s93
      %s96 = sphi 0, %s95
      %s110 = sphi 0, %s96
      %s114 = sphi 0, %s114
      %s116 = sphi 0, %s114
      %s117 = sphi 0, %s116
      %s131 = sphi 0, %s117
      %s135 = sphi 0, %s135
      %s137 = sphi 0, %s135
      %s138 = sphi 0, %s137
      %s152 = sphi 0, %s138
      %s156 = sphi 0, %s156
      %s158 = sphi 0, %s156
      %s159 = sphi 0, %s158
      %s173 = sphi 0, %s159
      %s177 = sphi 0, %s177
      %s179 = sphi 0, %s177
      %s180 = sphi 0, %s179
      %s194 = sphi 0, %s180
      %s202 = sphi 0, %s204
      %s205 = sphi 0, %s202
      %s206 = sphi 0, %s205
      %s222 = sphi 0, %s206
    $region4: #{tpu_custom_call.1} parent=1 // loop_header_branch
      %22 = sbr.rel (%p20) target = $region8
    $region5: #{tpu_custom_call.1} parent=1 // loop_body
      %s24 = ssub.s32 %s19, 1
      %s25 = ssub.s32 %s19, 2
      %s32 = sadd.s32 1, %s27
      %p33 = scmp.ge.s32.totalorder %s32, 2
      %s34 = scalar_select %p33, 0, %s32
      %s35 = sadd.s32 1, %s26
      %s36 = scalar_select %p33, %s35, %s26
      %p37 = scmp.ge.s32.totalorder %s36, 1
      %s38 = scalar_select %p37, 0, %s36
      %s39 = ssub.s32 %s26, %s38
      %p40 = scmp.eq.s32.totalorder %s39, 0
      %s42 = sadd.s32 %s41, 1
      %s43 = scalar_select %p40, %s41, %s42
      %p46 = pneg %p40
      %p47 = scmp.eq.s32.totalorder %s19, 1
      %p48 = por %p46, %p47
      %p49 = scmp.ne.s32.totalorder %s41, %s44
      %p50 = scmp.eq.s32.totalorder %s19, 0
      %p51 = por %p49, %p50
      %p52 = scmp.ne.s32.totalorder %s41, %s44
      %p53 = scmp.eq.s32.totalorder %s24, 1
      %p54 = por %p52, %p53
      %p55 = scmp.ne.s32.totalorder %s44, %s45
      %p56 = scmp.eq.s32.totalorder %s24, 0
      %p57 = por %p55, %p56
      %p58 = scmp.ne.s32.totalorder %s44, %s45
      %p59 = scmp.eq.s32.totalorder %s25, 1
      %p60 = por %p58, %p59
      %p62 = scmp.ne.s32.totalorder %s45, %s61
      %p63 = scmp.eq.s32.totalorder %s25, 0
      %p64 = por %p62, %p63
      %s65 = ssub.s32 %s26, %s38
      %s66 = ssub.s32 %s27, %s34
      %s67 = sor.u32 %s65, %s66
      %p68 = scmp.eq.s32.totalorder %s67, 0
      %s70 = sadd.s32 %s69, 1
      %s71 = scalar_select %p68, %s69, %s70
      %p74 = pneg %p68
      %p75 = scmp.eq.s32.totalorder %s19, 1
      %p76 = por %p74, %p75
      %p77 = scmp.ne.s32.totalorder %s69, %s72
      %p78 = scmp.eq.s32.totalorder %s19, 0
      %p79 = por %p77, %p78
      %p80 = scmp.ne.s32.totalorder %s69, %s72
      %p81 = scmp.eq.s32.totalorder %s24, 1
      %p82 = por %p80, %p81
      %p83 = scmp.ne.s32.totalorder %s72, %s73
      %p84 = scmp.eq.s32.totalorder %s24, 0
      %p85 = por %p83, %p84
      %p86 = scmp.ne.s32.totalorder %s72, %s73
      %p87 = scmp.eq.s32.totalorder %s25, 1
      %p88 = por %p86, %p87
      %p90 = scmp.ne.s32.totalorder %s73, %s89
      %p91 = scmp.eq.s32.totalorder %s25, 0
      %p92 = por %p90, %p91
      %s94 = sadd.s32 %s93, 1
      %p97 = scmp.eq.s32.totalorder %s19, 1
      %p98 = scmp.ne.s32.totalorder %s93, %s95
      %p99 = scmp.eq.s32.totalorder %s19, 0
      %p100 = por %p98, %p99
      %p101 = scmp.ne.s32.totalorder %s93, %s95
      %p102 = scmp.eq.s32.totalorder %s24, 1
      %p103 = por %p101, %p102
      %p104 = scmp.ne.s32.totalorder %s95, %s96
      %p105 = scmp.eq.s32.totalorder %s24, 0
      %p106 = por %p104, %p105
      %p107 = scmp.ne.s32.totalorder %s95, %s96
      %p108 = scmp.eq.s32.totalorder %s25, 1
      %p109 = por %p107, %p108
      %p111 = scmp.ne.s32.totalorder %s96, %s110
      %p112 = scmp.eq.s32.totalorder %s25, 0
      %p113 = por %p111, %p112
      %s115 = sadd.s32 %s114, 1
      %p118 = scmp.eq.s32.totalorder %s19, 1
      %p119 = scmp.ne.s32.totalorder %s114, %s116
      %p120 = scmp.eq.s32.totalorder %s19, 0
      %p121 = por %p119, %p120
      %p122 = scmp.ne.s32.totalorder %s114, %s116
      %p123 = scmp.eq.s32.totalorder %s24, 1
      %p124 = por %p122, %p123
      %p125 = scmp.ne.s32.totalorder %s116, %s117
      %p126 = scmp.eq.s32.totalorder %s24, 0
      %p127 = por %p125, %p126
      %p128 = scmp.ne.s32.totalorder %s116, %s117
      %p129 = scmp.eq.s32.totalorder %s25, 1
      %p130 = por %p128, %p129
      %p132 = scmp.ne.s32.totalorder %s117, %s131
      %p133 = scmp.eq.s32.totalorder %s25, 0
      %p134 = por %p132, %p133
      %s136 = sadd.s32 %s135, 1
      %p139 = scmp.eq.s32.totalorder %s19, 1
      %p140 = scmp.ne.s32.totalorder %s135, %s137
      %p141 = scmp.eq.s32.totalorder %s19, 0
      %p142 = por %p140, %p141
      %p143 = scmp.ne.s32.totalorder %s135, %s137
      %p144 = scmp.eq.s32.totalorder %s24, 1
      %p145 = por %p143, %p144
      %p146 = scmp.ne.s32.totalorder %s137, %s138
      %p147 = scmp.eq.s32.totalorder %s24, 0
      %p148 = por %p146, %p147
      %p149 = scmp.ne.s32.totalorder %s137, %s138
      %p150 = scmp.eq.s32.totalorder %s25, 1
      %p151 = por %p149, %p150
      %p153 = scmp.ne.s32.totalorder %s138, %s152
      %p154 = scmp.eq.s32.totalorder %s25, 0
      %p155 = por %p153, %p154
      %s157 = sadd.s32 %s156, 1
      %p160 = scmp.eq.s32.totalorder %s19, 1
      %p161 = scmp.ne.s32.totalorder %s156, %s158
      %p162 = scmp.eq.s32.totalorder %s19, 0
      %p163 = por %p161, %p162
      %p164 = scmp.ne.s32.totalorder %s156, %s158
      %p165 = scmp.eq.s32.totalorder %s24, 1
      %p166 = por %p164, %p165
      %p167 = scmp.ne.s32.totalorder %s158, %s159
      %p168 = scmp.eq.s32.totalorder %s24, 0
      %p169 = por %p167, %p168
      %p170 = scmp.ne.s32.totalorder %s158, %s159
      %p171 = scmp.eq.s32.totalorder %s25, 1
      %p172 = por %p170, %p171
      %p174 = scmp.ne.s32.totalorder %s159, %s173
      %p175 = scmp.eq.s32.totalorder %s25, 0
      %p176 = por %p174, %p175
      %s178 = sadd.s32 %s177, 1
      %p181 = scmp.eq.s32.totalorder %s19, 1
      %p182 = scmp.ne.s32.totalorder %s177, %s179
      %p183 = scmp.eq.s32.totalorder %s19, 0
      %p184 = por %p182, %p183
      %p185 = scmp.ne.s32.totalorder %s177, %s179
      %p186 = scmp.eq.s32.totalorder %s24, 1
      %p187 = por %p185, %p186
      %p188 = scmp.ne.s32.totalorder %s179, %s180
      %p189 = scmp.eq.s32.totalorder %s24, 0
      %p190 = por %p188, %p189
      %p191 = scmp.ne.s32.totalorder %s179, %s180
      %p192 = scmp.eq.s32.totalorder %s25, 1
      %p193 = por %p191, %p192
      %p195 = scmp.ne.s32.totalorder %s180, %s194
      %p196 = scmp.eq.s32.totalorder %s25, 0
      %p197 = por %p195, %p196
      %s198 = ssub.s32 %s26, %s38
      %s199 = ssub.s32 %s27, %s34
      %s200 = sor.u32 %s198, %s199
      %p201 = scmp.eq.s32.totalorder %s200, 0
      %s203 = sadd.s32 %s202, 1
      %s204 = scalar_select %p201, %s202, %s203
      %p207 = pneg %p201
      %p208 = scmp.eq.s32.totalorder %s19, 1
      %p209 = por %p207, %p208
      %p210 = scmp.ne.s32.totalorder %s202, %s205
      %p211 = scmp.eq.s32.totalorder %s19, 0
      %p212 = por %p210, %p211
      %p213 = scmp.ne.s32.totalorder %s202, %s205
      %p214 = scmp.eq.s32.totalorder %s24, 1
      %p215 = por %p213, %p214
      %p216 = scmp.ne.s32.totalorder %s205, %s206
      %p217 = scmp.eq.s32.totalorder %s24, 0
      %p218 = por %p216, %p217
      %p219 = scmp.ne.s32.totalorder %s205, %s206
      %p220 = scmp.eq.s32.totalorder %s25, 1
      %p221 = por %p219, %p220
      %p223 = scmp.ne.s32.totalorder %s206, %s222
      %p224 = scmp.eq.s32.totalorder %s25, 0
      %p225 = por %p223, %p224
      %p226 = scmp.le.s32.totalorder 1, %s19
      %p227 = scmp.lt.s32.totalorder %s19, 3
      %p228 = pnand %p226, %p227
      %p229 = pneg %p228
      // Predicated region
      $region9: #{tpu_custom_call.1} parent=5 // pred_check
        _
      $region10: #{tpu_custom_call.1} parent=5 // pred_check_branch
        %231 = sbr.rel (%p228) target = $region12
      $region11: #{tpu_custom_call.1} parent=5 // pred_region
        %s232 = ssub.s32 %s19, 1
        // Predicated region
        $region13: #{tpu_custom_call.1} parent=11 // pred_check
          %p233 = pneg %p57
        $region14: #{tpu_custom_call.1} parent=11 // pred_check_branch
          %235 = sbr.rel (%p233) target = $region16
        $region15: #{tpu_custom_call.1} parent=11 // pred_region
          %p236 = scmp.lt.s32.totalorder %s28, 0
          %s237 = scalar_select %p236, %s28, 0
          %s238 = smul.addr %s237, 8
          %s239 = scalar_lea.vmem %s1, %s238
        $region16: #{tpu_custom_call.1} parent=11 // pred_fallthru
          _
        // Predicated region
        $region17: #{tpu_custom_call.1} parent=11 // pred_check
          %p240 = pneg %p106
        $region18: #{tpu_custom_call.1} parent=11 // pred_check_branch
          %242 = sbr.rel (%p240) target = $region20
        $region19: #{tpu_custom_call.1} parent=11 // pred_region
          _
        $region20: #{tpu_custom_call.1} parent=11 // pred_fallthru
          _
        // Predicated region
        $region21: #{tpu_custom_call.1} parent=11 // pred_check
          %p243 = pneg %p127
        $region22: #{tpu_custom_call.1} parent=11 // pred_check_branch
          %245 = sbr.rel (%p243) target = $region24
        $region23: #{tpu_custom_call.1} parent=11 // pred_region
          %s247 = ssub.s32 512, 512
          %248 = vsyncadd [#allocation10], %s247
          %s249 = sshll.u32 [#allocation9], 4
          %s250 = int_to_ptr.vmem [resolvable:$true] %s249
          %255 = dma.hbm_to_vmem [thread:$0]  %s4, 512, %s250, [#allocation10], 128, 128, 8
        $region24: #{tpu_custom_call.1} parent=11 // pred_fallthru
          _
        // Predicated region
        $region25: #{tpu_custom_call.1} parent=11 // pred_check
          %p256 = pneg %p148
        $region26: #{tpu_custom_call.1} parent=11 // pred_check_branch
          %258 = sbr.rel (%p256) target = $region28
        $region27: #{tpu_custom_call.1} parent=11 // pred_region
          _
        $region28: #{tpu_custom_call.1} parent=11 // pred_fallthru
          _
        // Predicated region
        $region29: #{tpu_custom_call.1} parent=11 // pred_check
          %p259 = pneg %p169
        $region30: #{tpu_custom_call.1} parent=11 // pred_check_branch
          %261 = sbr.rel (%p259) target = $region32
        $region31: #{tpu_custom_call.1} parent=11 // pred_region
          _
        $region32: #{tpu_custom_call.1} parent=11 // pred_fallthru
          _
        // Predicated region
        $region33: #{tpu_custom_call.1} parent=11 // pred_check
          %p262 = pneg %p190
        $region34: #{tpu_custom_call.1} parent=11 // pred_check_branch
          %264 = sbr.rel (%p262) target = $region36
        $region35: #{tpu_custom_call.1} parent=11 // pred_region
          _
        $region36: #{tpu_custom_call.1} parent=11 // pred_fallthru
          _
      $region12: #{tpu_custom_call.1} parent=5 // pred_fallthru
        _
      %p265 = scmp.lt.s32.totalorder %s19, 2
      // Predicated region
      $region37: #{tpu_custom_call.1} parent=5 // pred_check
        %p266 = pneg %p265
      $region38: #{tpu_custom_call.1} parent=5 // pred_check_branch
        %268 = sbr.rel (%p266) target = $region40
      $region39: #{tpu_custom_call.1} parent=5 // pred_region
        // Predicated region
        $region41: #{tpu_custom_call.1} parent=39 // pred_check
          %p269 = pneg %p79
        $region42: #{tpu_custom_call.1} parent=39 // pred_check_branch
          %271 = sbr.rel (%p269) target = $region44
        $region43: #{tpu_custom_call.1} parent=39 // pred_region
          %s272 = sand.u32 %s69, 1
          %s273 = scalar_lea.sflag [#allocation8], %s272
          %s274 = sand.u32 %s69, 1
          %s275 = smul.addr %s274, 32
          %s276 = scalar_lea.vmem [#allocation7], %s275
          %s277 = smul.u32 4, %s27
          %s279 = ssub.s32 512, 512
          %280 = vsyncadd %s273, %s279
          %s281 = smul.addr %s26, 8
          %s282 = sadd.s32 %s277, %s281
          %s283 = smul.addr %s282, 128
          %s284 = scalar_lea.hbm %s2, %s283
          %s285 = sshll.u32 %s276, 4
          %s286 = int_to_ptr.vmem [resolvable:$true] %s285
          %291 = dma.hbm_to_vmem [thread:$0]  %s284, 512, %s286, %s273, 128, 128, 8
        $region44: #{tpu_custom_call.1} parent=39 // pred_fallthru
          _
      $region40: #{tpu_custom_call.1} parent=5 // pred_fallthru
        _
      %p292 = scmp.le.s32.totalorder 1, %s19
      %p293 = scmp.lt.s32.totalorder %s19, 3
      %p294 = pnand %p292, %p293
      %p295 = pneg %p294
      // Predicated region
      $region45: #{tpu_custom_call.1} parent=5 // pred_check
        _
      $region46: #{tpu_custom_call.1} parent=5 // pred_check_branch
        %297 = sbr.rel (%p294) target = $region48
      $region47: #{tpu_custom_call.1} parent=5 // pred_region
        %s298 = ssub.s32 %s19, 1
        %s299 = sand.u32 %s72, 1
        %s300 = scalar_lea.sflag [#allocation8], %s299
        %s301 = sand.u32 %s72, 1
        %s302 = smul.addr %s301, 32
        %s303 = scalar_lea.vmem [#allocation7], %s302
        // Predicated region
        $region49: #{tpu_custom_call.1} parent=47 // pred_check
          %p304 = pneg %p85
        $region50: #{tpu_custom_call.1} parent=47 // pred_check_branch
          %306 = sbr.rel (%p304) target = $region52
        $region51: #{tpu_custom_call.1} parent=47 // pred_region
          %307 = dma.done %s300, 512
        $region52: #{tpu_custom_call.1} parent=47 // pred_fallthru
          _
        // Predicated region
        $region53: #{tpu_custom_call.1} parent=47 // pred_check
          %p308 = pneg %p127
        $region54: #{tpu_custom_call.1} parent=47 // pred_check_branch
          %310 = sbr.rel (%p308) target = $region56
        $region55: #{tpu_custom_call.1} parent=47 // pred_region
          %311 = dma.done [#allocation10], 512
        $region56: #{tpu_custom_call.1} parent=47 // pred_fallthru
          _
        %p312 = scmp.lt.s32.totalorder %s28, 0
        %s313 = scalar_select %p312, %s28, 0
        %s314 = smul.addr %s313, 8
        %s315 = scalar_lea.vmem %s1, %s314
        %p316 = pneg %p57
        %p317 = pneg %p54
        %s318 = sand.u32 %s72, 1
        %s319 = scalar_lea.sflag [#allocation8], %s318
        %s320 = sand.u32 %s72, 1
        %s321 = smul.addr %s320, 32
        %s322 = scalar_lea.vmem [#allocation7], %s321
        %p323 = pneg %p85
        %p324 = pneg %p82
        %p325 = pneg %p106
        %p326 = pneg %p103
        %p327 = pneg %p127
        %p328 = pneg %p124
        %p329 = pneg %p148
        %p330 = pneg %p145
        %p331 = pneg %p169
        %p332 = pneg %p166
        %p333 = pneg %p190
        %p334 = pneg %p187
        %p335 = pneg %p218
        %p336 = pneg %p215
        %s337 = smul.u32 4, %s29
        %p338 = scmp.lt.s32.totalorder %s28, 0
        %s339 = scalar_select %p338, %s28, 0
        %p340 = scmp.lt.s32.totalorder %s337, 7
        %s341 = scalar_select %p340, %s337, 7
        %s342 = smul.addr %s339, 8
        %s343 = sadd.s32 %s341, %s342
        %s344 = smul.addr %s343, 8
        %s345 = scalar_lea.vmem %s8, %s344
        %p346 = scmp.lt.s32.totalorder %s28, 0
        %s347 = scalar_select %p346, %s28, 0
        %s348 = smul.addr %s347, 8
        %s349 = scalar_lea.vmem %s1, %s348
        %s350 = smul.u32 4, %s29
        %s351 = smul.u32 4, %s29
        %p352 = scmp.lt.s32.totalorder %s28, 0
        %s353 = scalar_select %p352, %s28, 0
        %p354 = scmp.lt.s32.totalorder %s351, 7
        %s355 = scalar_select %p354, %s351, 7
        %s356 = smul.addr %s353, 8
        %s357 = sadd.s32 %s355, %s356
        %s358 = smul.addr %s357, 8
        %s359 = scalar_lea.vmem %s8, %s358
        %s360 = smul.u32 4, %s29
        %p361 = scmp.eq.s32.totalorder %s29, 0
        // Predicated region
        $region57: #{tpu_custom_call.1} parent=47 // pred_check
          %p362 = pneg %p361
        $region58: #{tpu_custom_call.1} parent=47 // pred_check_branch
          %364 = sbr.rel (%p362) target = $region60
        $region59: #{tpu_custom_call.1} parent=47 // pred_region
          %vm365 = vcmask 261120
          %366 = vst.msk [vmem:[#allocation2] sm:$0xff] %vm365, 0.0
          %367 = vst.msk [vmem:[#allocation3] sm:$0xff] %vm365, 0.0
        $region60: #{tpu_custom_call.1} parent=47 // pred_fallthru
          _
        %s368 = smul.u32 %s29, 4
        %s369 = sld [smem:[#allocation6 + %s28]]
        %v370 = vld [vmem:[%s349] sm:$0xff]
        %v371 = vld [vmem:[%s3] sm:$0xff]
        %v372 = vld [vmem:[%s3 + $0x8] sm:$0xff]
        %v373 = vld [vmem:[%s3 + $0x10] sm:$0xff]
        %v374 = vld [vmem:[%s3 + $0x18] sm:$0xff]
        %p375 = scmp.ge.s32.totalorder %s368, %s369
        // Predicated region
        $region61: #{tpu_custom_call.1} parent=47 // pred_check
          %p376 = pneg %p375
        $region62: #{tpu_custom_call.1} parent=47 // pred_check_branch
          %378 = sbr.rel (%p376) target = $region64
        $region63: #{tpu_custom_call.1} parent=47 // pred_region
          %vm379 = vcmask 261120
          %380 = vst.msk [vmem:[#allocation4] sm:$0xff] %vm379, 0.0
          %381 = vst.msk [vmem:[#allocation4 + $0x8] sm:$0xff] %vm379, 0.0
          %382 = vst.msk [vmem:[#allocation4 + $0x10] sm:$0xff] %vm379, 0.0
          %383 = vst.msk [vmem:[#allocation4 + $0x18] sm:$0xff] %vm379, 0.0
        $region64: #{tpu_custom_call.1} parent=47 // pred_fallthru
          _
        %p384 = scmp.lt.s32.totalorder %s368, %s369
        // Predicated region
        $region65: #{tpu_custom_call.1} parent=47 // pred_check
          %p385 = pneg %p384
        $region66: #{tpu_custom_call.1} parent=47 // pred_check_branch
          %387 = sbr.rel (%p385) target = $region68
        $region67: #{tpu_custom_call.1} parent=47 // pred_region
          %v388 = vld [vmem:[#allocation2] sm:$0xff]
          %v389 = vld [vmem:[#allocation3] sm:$0xff]
          %v390 = vld [vmem:[%s303] sm:$0xff]
          %vm391 = vcmask 261120
          %v393 = vsel %vm391, %v388, 0
          %395 = vmatprep.subr.mxu0 0.0
          %396 = vmatpush1.msra.mxu0 %v371
          %397 = vmatprep.subr.mxu0 0.0
          %398 = vmatpush1.msra.mxu0 %v372
          %399 = vmatprep.subr.mxu0 0.0
          %400 = vmatpush1.msra.mxu0 %v373
          %401 = vmatprep.subr.mxu0 0.0
          %402 = vmatpush1.msra.mxu0 %v374
          %403 = vmatprep.subr.mxu0 0.0
          %404 = vmatpush1.msra.mxu0 0.0
          %405 = vmatprep.subr.mxu0 0.0
          %406 = vmatpush1.msra.mxu0 0.0
          %407 = vmatprep.subr.mxu0 0.0
          %408 = vmatpush1.msra.mxu0 0.0
          %409 = vmatprep.subr.mxu0 0.0
          %410 = vmatpush1.msra.mxu0 0.0
          %411 = vmatprep.subr.mxu0 0.0
          %412 = vmatpush1.msra.mxu0 0.0
          %413 = vmatprep.subr.mxu0 0.0
          %414 = vmatpush1.msra.mxu0 0.0
          %415 = vmatprep.subr.mxu0 0.0
          %416 = vmatpush1.msra.mxu0 0.0
          %417 = vmatprep.subr.mxu0 0.0
          %418 = vmatpush1.msra.mxu0 0.0
          %419 = vmatprep.subr.mxu0 0.0
          %420 = vmatpush1.msra.mxu0 0.0
          %421 = vmatprep.subr.mxu0 0.0
          %422 = vmatpush1.msra.mxu0 0.0
          %423 = vmatprep.subr.mxu0 0.0
          %424 = vmatpush1.msra.mxu0 0.0
          %425 = vmatprep.subr.mxu0 0.0
          %426 = vmatpush1.msra.mxu0 0.0
          %427 = vmatprep.subr.mxu0 0.0
          %428 = vmatpush1.msra.mxu0 0.0
          %429 = vmatprep.subr.mxu0 0.0
          %430 = vmatpush1.msra.mxu0 0.0
          %431 = vmatprep.subr.mxu0 0.0
          %432 = vmatpush1.msra.mxu0 0.0
          %433 = vmatprep.subr.mxu0 0.0
          %434 = vmatpush1.msra.mxu0 0.0
          %435 = vmatprep.subr.mxu0 0.0
          %436 = vmatpush1.msra.mxu0 0.0
          %437 = vmatprep.subr.mxu0 0.0
          %438 = vmatpush1.msra.mxu0 0.0
          %439 = vmatprep.subr.mxu0 0.0
          %440 = vmatpush1.msra.mxu0 0.0
          %441 = vmatprep.subr.mxu0 0.0
          %442 = vmatpush1.msra.mxu0 0.0
          %443 = vmatprep.subr.mxu0 0.0
          %444 = vmatpush1.msra.mxu0 0.0
          %445 = vmatprep.subr.mxu0 0.0
          %446 = vmatpush1.msra.mxu0 0.0
          %447 = vmatprep.subr.mxu0 0.0
          %448 = vmatpush1.msra.mxu0 0.0
          %449 = vmatprep.subr.mxu0 0.0
          %450 = vmatpush1.msra.mxu0 0.0
          %451 = vmatprep.subr.mxu0 0.0
          %452 = vmatpush1.msra.mxu0 0.0
          %453 = vmatprep.subr.mxu0 0.0
          %454 = vmatpush1.msra.mxu0 0.0
          %455 = vmatprep.subr.mxu0 0.0
          %456 = vmatpush1.msra.mxu0 0.0
          %457 = vmatprep.subr.mxu0 0.0
          %458 = vmatpush1.msra.mxu0 0.0
          %459 = vmatprep.mubr.f32.mxu0 0.0
          %460 = vmatmul.mubr.f32.gmra.mrb[0].mxu0 %v393
          %v461 = vpop.f32.mrb[0].mxu0
          %v462 = vadd.f32 0.0, %v461
          %v463 = vpop.f32.mrb[0].mxu0
          %464 = vdwg.mxu0
          %v465 = vadd.f32 %v390, %v462
          %v466 = vmul.f32 %v465, 0.5
          %v467 = vtanh.pop %v466
          %v468 = vmul.f32 %v467, 0.5
          %v469 = vadd.f32 %v468, 0.5
          %v470 = vtanh.pop %v465
          %472 = vrot.lane.b32.xlu0 %v389, 32
          %v473 = vpop.permute.xlu0 %472
          %v475 = vmul.f32 %v469, %v473
          %477 = vrot.lane.b32.xlu0 %v470, 64
          %v478 = vpop.permute.xlu0 %477
          %v480 = vmul.f32 %v469, %v478
          %482 = vrot.lane.b32.xlu0 %v480, 32
          %v483 = vpop.permute.xlu0 %482
          %v485 = vadd.f32 %v475, %v483
          %v486 = vtanh.pop %v485
          %488 = vrot.lane.b32.xlu0 %v486, 64
          %v489 = vpop.permute.xlu0 %488
          %v491 = vmul.f32 %v469, %v489
          %v492 = vstv %s368
          %vm493 = vcmp.gt.s32.totalorder %v370, %v492
          %v494 = vsel %vm493, 1, 0
          %495 = vset.pattern.permute.xlu0 0
          %496 = vperm.xlu0 %495, %v494
          %v497 = vpop.permute.xlu0 %496
          %vm498 = vcmp.eq.s32.totalorder %v497, 1
          %499 = vrot.lane.b32.xlu0 %v388, 96
          %v500 = vpop.permute.xlu0 %499
          %v502 = vsel %vm498, %v491, %v500
          %v503 = vsel %vm498, %v485, %v473
          %v504 = vsel %vm498, %v491, 0.0
          %506 = vrot.lane.b32.xlu0 %v504, 32
          %v507 = vpop.permute.xlu0 %506
          %509 = vst.msk [vmem:[#allocation4] sm:$0xff] %vm391, %v507
          %s510 = scalar_lea.vmem %s303, 8 [#allocation7]
          %v511 = vld [vmem:[%s510] sm:$0xff]
          %513 = vrot.lane.b32.xlu0 %v502, 32
          %v514 = vpop.permute.xlu0 %513
          %v515 = vsel %vm391, %v514, 0
          %517 = vmatprep.subr.mxu0 0.0
          %518 = vmatpush1.msra.mxu0 %v371
          %519 = vmatprep.subr.mxu0 0.0
          %520 = vmatpush1.msra.mxu0 %v372
          %521 = vmatprep.subr.mxu0 0.0
          %522 = vmatpush1.msra.mxu0 %v373
          %523 = vmatprep.subr.mxu0 0.0
          %524 = vmatpush1.msra.mxu0 %v374
          %525 = vmatprep.subr.mxu0 0.0
          %526 = vmatpush1.msra.mxu0 0.0
          %527 = vmatprep.subr.mxu0 0.0
          %528 = vmatpush1.msra.mxu0 0.0
          %529 = vmatprep.subr.mxu0 0.0
          %530 = vmatpush1.msra.mxu0 0.0
          %531 = vmatprep.subr.mxu0 0.0
          %532 = vmatpush1.msra.mxu0 0.0
          %533 = vmatprep.subr.mxu0 0.0
          %534 = vmatpush1.msra.mxu0 0.0
          %535 = vmatprep.subr.mxu0 0.0
          %536 = vmatpush1.msra.mxu0 0.0
          %537 = vmatprep.subr.mxu0 0.0
          %538 = vmatpush1.msra.mxu0 0.0
          %539 = vmatprep.subr.mxu0 0.0
          %540 = vmatpush1.msra.mxu0 0.0
          %541 = vmatprep.subr.mxu0 0.0
          %542 = vmatpush1.msra.mxu0 0.0
          %543 = vmatprep.subr.mxu0 0.0
          %544 = vmatpush1.msra.mxu0 0.0
          %545 = vmatprep.subr.mxu0 0.0
          %546 = vmatpush1.msra.mxu0 0.0
          %547 = vmatprep.subr.mxu0 0.0
          %548 = vmatpush1.msra.mxu0 0.0
          %549 = vmatprep.subr.mxu0 0.0
          %550 = vmatpush1.msra.mxu0 0.0
          %551 = vmatprep.subr.mxu0 0.0
          %552 = vmatpush1.msra.mxu0 0.0
          %553 = vmatprep.subr.mxu0 0.0
          %554 = vmatpush1.msra.mxu0 0.0
          %555 = vmatprep.subr.mxu0 0.0
          %556 = vmatpush1.msra.mxu0 0.0
          %557 = vmatprep.subr.mxu0 0.0
          %558 = vmatpush1.msra.mxu0 0.0
          %559 = vmatprep.subr.mxu0 0.0
          %560 = vmatpush1.msra.mxu0 0.0
          %561 = vmatprep.subr.mxu0 0.0
          %562 = vmatpush1.msra.mxu0 0.0
          %563 = vmatprep.subr.mxu0 0.0
          %564 = vmatpush1.msra.mxu0 0.0
          %565 = vmatprep.subr.mxu0 0.0
          %566 = vmatpush1.msra.mxu0 0.0
          %567 = vmatprep.subr.mxu0 0.0
          %568 = vmatpush1.msra.mxu0 0.0
          %569 = vmatprep.subr.mxu0 0.0
          %570 = vmatpush1.msra.mxu0 0.0
          %571 = vmatprep.subr.mxu0 0.0
          %572 = vmatpush1.msra.mxu0 0.0
          %573 = vmatprep.subr.mxu0 0.0
          %574 = vmatpush1.msra.mxu0 0.0
          %575 = vmatprep.subr.mxu0 0.0
          %576 = vmatpush1.msra.mxu0 0.0
          %577 = vmatprep.subr.mxu0 0.0
          %578 = vmatpush1.msra.mxu0 0.0
          %579 = vmatprep.subr.mxu0 0.0
          %580 = vmatpush1.msra.mxu0 0.0
          %581 = vmatprep.mubr.f32.mxu0 0.0
          %582 = vmatmul.mubr.f32.gmra.mrb[0].mxu0 %v515
          %v583 = vpop.f32.mrb[0].mxu0
          %v584 = vadd.f32 0.0, %v583
          %v585 = vpop.f32.mrb[0].mxu0
          %586 = vdwg.mxu0
          %v587 = vadd.f32 %v511, %v584
          %v588 = vmul.f32 %v587, 0.5
          %v589 = vtanh.pop %v588
          %v590 = vmul.f32 %v589, 0.5
          %v591 = vadd.f32 %v590, 0.5
          %v592 = vtanh.pop %v587
          %v593 = vmul.f32 %v591, %v503
          %595 = vrot.lane.b32.xlu0 %v592, 64
          %v596 = vpop.permute.xlu0 %595
          %v598 = vmul.f32 %v591, %v596
          %600 = vrot.lane.b32.xlu0 %v598, 32
          %v601 = vpop.permute.xlu0 %600
          %v603 = vadd.f32 %v593, %v601
          %v604 = vtanh.pop %v603
          %606 = vrot.lane.b32.xlu0 %v604, 64
          %v607 = vpop.permute.xlu0 %606
          %v609 = vmul.f32 %v591, %v607
          %s610 = sadd.s32 %s368, 1
          %v611 = vstv %s610
          %vm612 = vcmp.gt.s32.totalorder %v370, %v611
          %v613 = vsel %vm612, 1, 0
          %614 = vset.pattern.permute.xlu0 0
          %615 = vperm.xlu0 %614, %v613
          %v616 = vpop.permute.xlu0 %615
          %vm617 = vcmp.eq.s32.totalorder %v616, 1
          %v618 = vsel %vm617, %v609, %v502
          %v619 = vsel %vm617, %v603, %v503
          %v620 = vsel %vm617, %v609, 0.0
          %622 = vrot.lane.b32.xlu0 %v620, 32
          %v623 = vpop.permute.xlu0 %622
          %s625 = scalar_lea.vmem [#allocation4], 8
          %626 = vst.msk [vmem:[%s625] sm:$0xff] %vm391, %v623
          %s627 = scalar_lea.vmem %s303, 16 [#allocation7]
          %v628 = vld [vmem:[%s627] sm:$0xff]
          %630 = vrot.lane.b32.xlu0 %v618, 32
          %v631 = vpop.permute.xlu0 %630
          %v632 = vsel %vm391, %v631, 0
          %634 = vmatprep.subr.mxu0 0.0
          %635 = vmatpush1.msra.mxu0 %v371
          %636 = vmatprep.subr.mxu0 0.0
          %637 = vmatpush1.msra.mxu0 %v372
          %638 = vmatprep.subr.mxu0 0.0
          %639 = vmatpush1.msra.mxu0 %v373
          %640 = vmatprep.subr.mxu0 0.0
          %641 = vmatpush1.msra.mxu0 %v374
          %642 = vmatprep.subr.mxu0 0.0
          %643 = vmatpush1.msra.mxu0 0.0
          %644 = vmatprep.subr.mxu0 0.0
          %645 = vmatpush1.msra.mxu0 0.0
          %646 = vmatprep.subr.mxu0 0.0
          %647 = vmatpush1.msra.mxu0 0.0
          %648 = vmatprep.subr.mxu0 0.0
          %649 = vmatpush1.msra.mxu0 0.0
          %650 = vmatprep.subr.mxu0 0.0
          %651 = vmatpush1.msra.mxu0 0.0
          %652 = vmatprep.subr.mxu0 0.0
          %653 = vmatpush1.msra.mxu0 0.0
          %654 = vmatprep.subr.mxu0 0.0
          %655 = vmatpush1.msra.mxu0 0.0
          %656 = vmatprep.subr.mxu0 0.0
          %657 = vmatpush1.msra.mxu0 0.0
          %658 = vmatprep.subr.mxu0 0.0
          %659 = vmatpush1.msra.mxu0 0.0
          %660 = vmatprep.subr.mxu0 0.0
          %661 = vmatpush1.msra.mxu0 0.0
          %662 = vmatprep.subr.mxu0 0.0
          %663 = vmatpush1.msra.mxu0 0.0
          %664 = vmatprep.subr.mxu0 0.0
          %665 = vmatpush1.msra.mxu0 0.0
          %666 = vmatprep.subr.mxu0 0.0
          %667 = vmatpush1.msra.mxu0 0.0
          %668 = vmatprep.subr.mxu0 0.0
          %669 = vmatpush1.msra.mxu0 0.0
          %670 = vmatprep.subr.mxu0 0.0
          %671 = vmatpush1.msra.mxu0 0.0
          %672 = vmatprep.subr.mxu0 0.0
          %673 = vmatpush1.msra.mxu0 0.0
          %674 = vmatprep.subr.mxu0 0.0
          %675 = vmatpush1.msra.mxu0 0.0
          %676 = vmatprep.subr.mxu0 0.0
          %677 = vmatpush1.msra.mxu0 0.0
          %678 = vmatprep.subr.mxu0 0.0
          %679 = vmatpush1.msra.mxu0 0.0
          %680 = vmatprep.subr.mxu0 0.0
          %681 = vmatpush1.msra.mxu0 0.0
          %682 = vmatprep.subr.mxu0 0.0
          %683 = vmatpush1.msra.mxu0 0.0
          %684 = vmatprep.subr.mxu0 0.0
          %685 = vmatpush1.msra.mxu0 0.0
          %686 = vmatprep.subr.mxu0 0.0
          %687 = vmatpush1.msra.mxu0 0.0
          %688 = vmatprep.subr.mxu0 0.0
          %689 = vmatpush1.msra.mxu0 0.0
          %690 = vmatprep.subr.mxu0 0.0
          %691 = vmatpush1.msra.mxu0 0.0
          %692 = vmatprep.subr.mxu0 0.0
          %693 = vmatpush1.msra.mxu0 0.0
          %694 = vmatprep.subr.mxu0 0.0
          %695 = vmatpush1.msra.mxu0 0.0
          %696 = vmatprep.subr.mxu0 0.0
          %697 = vmatpush1.msra.mxu0 0.0
          %698 = vmatprep.mubr.f32.mxu0 0.0
          %699 = vmatmul.mubr.f32.gmra.mrb[0].mxu0 %v632
          %v700 = vpop.f32.mrb[0].mxu0
          %v701 = vadd.f32 0.0, %v700
          %v702 = vpop.f32.mrb[0].mxu0
          %703 = vdwg.mxu0
          %v704 = vadd.f32 %v628, %v701
          %v705 = vmul.f32 %v704, 0.5
          %v706 = vtanh.pop %v705
          %v707 = vmul.f32 %v706, 0.5
          %v708 = vadd.f32 %v707, 0.5
          %v709 = vtanh.pop %v704
          %v710 = vmul.f32 %v708, %v619
          %712 = vrot.lane.b32.xlu0 %v709, 64
          %v713 = vpop.permute.xlu0 %712
          %v715 = vmul.f32 %v708, %v713
          %717 = vrot.lane.b32.xlu0 %v715, 32
          %v718 = vpop.permute.xlu0 %717
          %v720 = vadd.f32 %v710, %v718
          %v721 = vtanh.pop %v720
          %723 = vrot.lane.b32.xlu0 %v721, 64
          %v724 = vpop.permute.xlu0 %723
          %v726 = vmul.f32 %v708, %v724
          %s727 = sadd.s32 %s368, 2
          %v728 = vstv %s727
          %vm729 = vcmp.gt.s32.totalorder %v370, %v728
          %v730 = vsel %vm729, 1, 0
          %731 = vset.pattern.permute.xlu0 0
          %732 = vperm.xlu0 %731, %v730
          %v733 = vpop.permute.xlu0 %732
          %vm734 = vcmp.eq.s32.totalorder %v733, 1
          %v735 = vsel %vm734, %v726, %v618
          %v736 = vsel %vm734, %v720, %v619
          %v737 = vsel %vm734, %v726, 0.0
          %739 = vrot.lane.b32.xlu0 %v737, 32
          %v740 = vpop.permute.xlu0 %739
          %s742 = scalar_lea.vmem [#allocation4], 16
          %743 = vst.msk [vmem:[%s742] sm:$0xff] %vm391, %v740
          %s744 = scalar_lea.vmem %s303, 24 [#allocation7]
          %v745 = vld [vmem:[%s744] sm:$0xff]
          %747 = vrot.lane.b32.xlu0 %v735, 32
          %v748 = vpop.permute.xlu0 %747
          %v749 = vsel %vm391, %v748, 0
          %751 = vmatprep.subr.mxu0 0.0
          %752 = vmatpush1.msra.mxu0 %v371
          %753 = vmatprep.subr.mxu0 0.0
          %754 = vmatpush1.msra.mxu0 %v372
          %755 = vmatprep.subr.mxu0 0.0
          %756 = vmatpush1.msra.mxu0 %v373
          %757 = vmatprep.subr.mxu0 0.0
          %758 = vmatpush1.msra.mxu0 %v374
          %759 = vmatprep.subr.mxu0 0.0
          %760 = vmatpush1.msra.mxu0 0.0
          %761 = vmatprep.subr.mxu0 0.0
          %762 = vmatpush1.msra.mxu0 0.0
          %763 = vmatprep.subr.mxu0 0.0
          %764 = vmatpush1.msra.mxu0 0.0
          %765 = vmatprep.subr.mxu0 0.0
          %766 = vmatpush1.msra.mxu0 0.0
          %767 = vmatprep.subr.mxu0 0.0
          %768 = vmatpush1.msra.mxu0 0.0
          %769 = vmatprep.subr.mxu0 0.0
          %770 = vmatpush1.msra.mxu0 0.0
          %771 = vmatprep.subr.mxu0 0.0
          %772 = vmatpush1.msra.mxu0 0.0
          %773 = vmatprep.subr.mxu0 0.0
          %774 = vmatpush1.msra.mxu0 0.0
          %775 = vmatprep.subr.mxu0 0.0
          %776 = vmatpush1.msra.mxu0 0.0
          %777 = vmatprep.subr.mxu0 0.0
          %778 = vmatpush1.msra.mxu0 0.0
          %779 = vmatprep.subr.mxu0 0.0
          %780 = vmatpush1.msra.mxu0 0.0
          %781 = vmatprep.subr.mxu0 0.0
          %782 = vmatpush1.msra.mxu0 0.0
          %783 = vmatprep.subr.mxu0 0.0
          %784 = vmatpush1.msra.mxu0 0.0
          %785 = vmatprep.subr.mxu0 0.0
          %786 = vmatpush1.msra.mxu0 0.0
          %787 = vmatprep.subr.mxu0 0.0
          %788 = vmatpush1.msra.mxu0 0.0
          %789 = vmatprep.subr.mxu0 0.0
          %790 = vmatpush1.msra.mxu0 0.0
          %791 = vmatprep.subr.mxu0 0.0
          %792 = vmatpush1.msra.mxu0 0.0
          %793 = vmatprep.subr.mxu0 0.0
          %794 = vmatpush1.msra.mxu0 0.0
          %795 = vmatprep.subr.mxu0 0.0
          %796 = vmatpush1.msra.mxu0 0.0
          %797 = vmatprep.subr.mxu0 0.0
          %798 = vmatpush1.msra.mxu0 0.0
          %799 = vmatprep.subr.mxu0 0.0
          %800 = vmatpush1.msra.mxu0 0.0
          %801 = vmatprep.subr.mxu0 0.0
          %802 = vmatpush1.msra.mxu0 0.0
          %803 = vmatprep.subr.mxu0 0.0
          %804 = vmatpush1.msra.mxu0 0.0
          %805 = vmatprep.subr.mxu0 0.0
          %806 = vmatpush1.msra.mxu0 0.0
          %807 = vmatprep.subr.mxu0 0.0
          %808 = vmatpush1.msra.mxu0 0.0
          %809 = vmatprep.subr.mxu0 0.0
          %810 = vmatpush1.msra.mxu0 0.0
          %811 = vmatprep.subr.mxu0 0.0
          %812 = vmatpush1.msra.mxu0 0.0
          %813 = vmatprep.subr.mxu0 0.0
          %814 = vmatpush1.msra.mxu0 0.0
          %815 = vmatprep.mubr.f32.mxu0 0.0
          %816 = vmatmul.mubr.f32.gmra.mrb[0].mxu0 %v749
          %v817 = vpop.f32.mrb[0].mxu0
          %v818 = vadd.f32 0.0, %v817
          %v819 = vpop.f32.mrb[0].mxu0
          %820 = vdwg.mxu0
          %v821 = vadd.f32 %v745, %v818
          %v822 = vmul.f32 %v821, 0.5
          %v823 = vtanh.pop %v822
          %v824 = vmul.f32 %v823, 0.5
          %v825 = vadd.f32 %v824, 0.5
          %v826 = vtanh.pop %v821
          %v827 = vmul.f32 %v825, %v736
          %829 = vrot.lane.b32.xlu0 %v826, 64
          %v830 = vpop.permute.xlu0 %829
          %v832 = vmul.f32 %v825, %v830
          %834 = vrot.lane.b32.xlu0 %v832, 32
          %v835 = vpop.permute.xlu0 %834
          %v837 = vadd.f32 %v827, %v835
          %v838 = vtanh.pop %v837
          %840 = vrot.lane.b32.xlu0 %v838, 64
          %v841 = vpop.permute.xlu0 %840
          %v843 = vmul.f32 %v825, %v841
          %s844 = sadd.s32 %s368, 3
          %v845 = vstv %s844
          %vm846 = vcmp.gt.s32.totalorder %v370, %v845
          %v847 = vsel %vm846, 1, 0
          %848 = vset.pattern.permute.xlu0 0
          %849 = vperm.xlu0 %848, %v847
          %v850 = vpop.permute.xlu0 %849
          %vm851 = vcmp.eq.s32.totalorder %v850, 1
          %v852 = vsel %vm851, %v843, %v735
          %v853 = vsel %vm851, %v837, %v736
          %v854 = vsel %vm851, %v843, 0.0
          %856 = vrot.lane.b32.xlu0 %v854, 32
          %v857 = vpop.permute.xlu0 %856
          %s859 = scalar_lea.vmem [#allocation4], 24
          %860 = vst.msk [vmem:[%s859] sm:$0xff] %vm391, %v857
          %862 = vrot.lane.b32.xlu0 %v852, 32
          %v863 = vpop.permute.xlu0 %862
          %865 = vst.msk [vmem:[#allocation2] sm:$0xff] %vm391, %v863
          %867 = vrot.lane.b32.xlu0 %v853, 96
          %v868 = vpop.permute.xlu0 %867
          %870 = vst.msk [vmem:[#allocation3] sm:$0xff] %vm391, %v868
        $region68: #{tpu_custom_call.1} parent=47 // pred_fallthru
          _
        %v871 = vld [vmem:[#allocation4] sm:$0xff]
        %v872 = vld [vmem:[#allocation4 + $0x8] sm:$0xff]
        %v873 = vld [vmem:[#allocation4 + $0x10] sm:$0xff]
        %v874 = vld [vmem:[#allocation4 + $0x18] sm:$0xff]
        %v875 = vld [vmem:[#allocation9] sm:$0xff]
        %v876 = vld [vmem:[#allocation9 + $0x8] sm:$0xff]
        %v877 = vld [vmem:[#allocation9 + $0x10] sm:$0xff]
        %v878 = vld [vmem:[#allocation9 + $0x18] sm:$0xff]
        %v879 = vld [vmem:[%s5] sm:$0x1]
        %v881 = vlaneseq
        %v882 = vshrl.u32 %v881, 7
        %v883 = vsub.s32 0, %v882
        %v884 = vrot.slane %v879, %v883
        %vm886 = vcmask 261120
        %v888 = vsel %vm886, %v871, 0
        %v891 = vsel %vm886, %v872, 0
        %v894 = vsel %vm886, %v873, 0
        %v897 = vsel %vm886, %v874, 0
        %899 = vmatprep.subr.mxu0 0.0
        %900 = vmatpush1.msra.mxu0 %v875
        %901 = vmatprep.subr.mxu0 0.0
        %902 = vmatpush1.msra.mxu0 %v876
        %903 = vmatprep.subr.mxu0 0.0
        %904 = vmatpush1.msra.mxu0 %v877
        %905 = vmatprep.subr.mxu0 0.0
        %906 = vmatpush1.msra.mxu0 %v878
        %907 = vmatprep.subr.mxu0 0.0
        %908 = vmatpush1.msra.mxu0 0.0
        %909 = vmatprep.subr.mxu0 0.0
        %910 = vmatpush1.msra.mxu0 0.0
        %911 = vmatprep.subr.mxu0 0.0
        %912 = vmatpush1.msra.mxu0 0.0
        %913 = vmatprep.subr.mxu0 0.0
        %914 = vmatpush1.msra.mxu0 0.0
        %915 = vmatprep.subr.mxu0 0.0
        %916 = vmatpush1.msra.mxu0 0.0
        %917 = vmatprep.subr.mxu0 0.0
        %918 = vmatpush1.msra.mxu0 0.0
        %919 = vmatprep.subr.mxu0 0.0
        %920 = vmatpush1.msra.mxu0 0.0
        %921 = vmatprep.subr.mxu0 0.0
        %922 = vmatpush1.msra.mxu0 0.0
        %923 = vmatprep.subr.mxu0 0.0
        %924 = vmatpush1.msra.mxu0 0.0
        %925 = vmatprep.subr.mxu0 0.0
        %926 = vmatpush1.msra.mxu0 0.0
        %927 = vmatprep.subr.mxu0 0.0
        %928 = vmatpush1.msra.mxu0 0.0
        %929 = vmatprep.subr.mxu0 0.0
        %930 = vmatpush1.msra.mxu0 0.0
        %931 = vmatprep.subr.mxu0 0.0
        %932 = vmatpush1.msra.mxu0 0.0
        %933 = vmatprep.subr.mxu0 0.0
        %934 = vmatpush1.msra.mxu0 0.0
        %935 = vmatprep.subr.mxu0 0.0
        %936 = vmatpush1.msra.mxu0 0.0
        %937 = vmatprep.subr.mxu0 0.0
        %938 = vmatpush1.msra.mxu0 0.0
        %939 = vmatprep.subr.mxu0 0.0
        %940 = vmatpush1.msra.mxu0 0.0
        %941 = vmatprep.subr.mxu0 0.0
        %942 = vmatpush1.msra.mxu0 0.0
        %943 = vmatprep.subr.mxu0 0.0
        %944 = vmatpush1.msra.mxu0 0.0
        %945 = vmatprep.subr.mxu0 0.0
        %946 = vmatpush1.msra.mxu0 0.0
        %947 = vmatprep.subr.mxu0 0.0
        %948 = vmatpush1.msra.mxu0 0.0
        %949 = vmatprep.subr.mxu0 0.0
        %950 = vmatpush1.msra.mxu0 0.0
        %951 = vmatprep.subr.mxu0 0.0
        %952 = vmatpush1.msra.mxu0 0.0
        %953 = vmatprep.subr.mxu0 0.0
        %954 = vmatpush1.msra.mxu0 0.0
        %955 = vmatprep.subr.mxu0 0.0
        %956 = vmatpush1.msra.mxu0 0.0
        %957 = vmatprep.subr.mxu0 0.0
        %958 = vmatpush1.msra.mxu0 0.0
        %959 = vmatprep.subr.mxu0 0.0
        %960 = vmatpush1.msra.mxu0 0.0
        %961 = vmatprep.subr.mxu0 0.0
        %962 = vmatpush1.msra.mxu0 0.0
        %963 = vmatprep.mubr.f32.mxu0 0.0
        %964 = vmatmul.mubr.f32.gmra.mrb[0].mxu0 %v888
        %v965 = vpop.f32.mrb[0].mxu0
        %v966 = vadd.f32 %v884, %v965
        %v967 = vpop.f32.mrb[0].mxu0
        %968 = vmatprep.mubr.f32.mxu0 0.0
        %969 = vmatmul.mubr.f32.gmra.mrb[0].mxu0 %v891
        %v970 = vpop.f32.mrb[0].mxu0
        %v971 = vadd.f32 %v884, %v970
        %v972 = vpop.f32.mrb[0].mxu0
        %973 = vmatprep.mubr.f32.mxu0 0.0
        %974 = vmatmul.mubr.f32.gmra.mrb[0].mxu0 %v894
        %v975 = vpop.f32.mrb[0].mxu0
        %v976 = vadd.f32 %v884, %v975
        %v977 = vpop.f32.mrb[0].mxu0
        %978 = vmatprep.mubr.f32.mxu0 0.0
        %979 = vmatmul.mubr.f32.gmra.mrb[0].mxu0 %v897
        %v980 = vpop.f32.mrb[0].mxu0
        %v981 = vadd.f32 %v884, %v980
        %v982 = vpop.f32.mrb[0].mxu0
        %983 = vdwg.mxu0
        %v984 = vmax.f32 %v966, 0.0
        %v985 = vmax.f32 %v971, 0.0
        %v986 = vmax.f32 %v976, 0.0
        %v987 = vmax.f32 %v981, 0.0
        %v988 = vld [vmem:[%s6] sm:$0xff]
        %v989 = vld [vmem:[%s6 + $0x8] sm:$0xff]
        %v990 = vld [vmem:[%s6 + $0x10] sm:$0xff]
        %v991 = vld [vmem:[%s6 + $0x18] sm:$0xff]
        %v992 = vld [vmem:[%s7] sm:$0x1]
        %v994 = vlaneseq
        %v995 = vshrl.u32 %v994, 7
        %v996 = vsub.s32 0, %v995
        %v997 = vrot.slane %v992, %v996
        %v1000 = vsel %vm886, %v984, 0
        %v1003 = vsel %vm886, %v985, 0
        %v1006 = vsel %vm886, %v986, 0
        %v1009 = vsel %vm886, %v987, 0
        %1011 = vmatprep.subr.mxu0 0.0
        %1012 = vmatpush1.msra.mxu0 %v988
        %1013 = vmatprep.subr.mxu0 0.0
        %1014 = vmatpush1.msra.mxu0 %v989
        %1015 = vmatprep.subr.mxu0 0.0
        %1016 = vmatpush1.msra.mxu0 %v990
        %1017 = vmatprep.subr.mxu0 0.0
        %1018 = vmatpush1.msra.mxu0 %v991
        %1019 = vmatprep.subr.mxu0 0.0
        %1020 = vmatpush1.msra.mxu0 0.0
        %1021 = vmatprep.subr.mxu0 0.0
        %1022 = vmatpush1.msra.mxu0 0.0
        %1023 = vmatprep.subr.mxu0 0.0
        %1024 = vmatpush1.msra.mxu0 0.0
        %1025 = vmatprep.subr.mxu0 0.0
        %1026 = vmatpush1.msra.mxu0 0.0
        %1027 = vmatprep.subr.mxu0 0.0
        %1028 = vmatpush1.msra.mxu0 0.0
        %1029 = vmatprep.subr.mxu0 0.0
        %1030 = vmatpush1.msra.mxu0 0.0
        %1031 = vmatprep.subr.mxu0 0.0
        %1032 = vmatpush1.msra.mxu0 0.0
        %1033 = vmatprep.subr.mxu0 0.0
        %1034 = vmatpush1.msra.mxu0 0.0
        %1035 = vmatprep.subr.mxu0 0.0
        %1036 = vmatpush1.msra.mxu0 0.0
        %1037 = vmatprep.subr.mxu0 0.0
        %1038 = vmatpush1.msra.mxu0 0.0
        %1039 = vmatprep.subr.mxu0 0.0
        %1040 = vmatpush1.msra.mxu0 0.0
        %1041 = vmatprep.subr.mxu0 0.0
        %1042 = vmatpush1.msra.mxu0 0.0
        %1043 = vmatprep.subr.mxu0 0.0
        %1044 = vmatpush1.msra.mxu0 0.0
        %1045 = vmatprep.subr.mxu0 0.0
        %1046 = vmatpush1.msra.mxu0 0.0
        %1047 = vmatprep.subr.mxu0 0.0
        %1048 = vmatpush1.msra.mxu0 0.0
        %1049 = vmatprep.subr.mxu0 0.0
        %1050 = vmatpush1.msra.mxu0 0.0
        %1051 = vmatprep.subr.mxu0 0.0
        %1052 = vmatpush1.msra.mxu0 0.0
        %1053 = vmatprep.subr.mxu0 0.0
        %1054 = vmatpush1.msra.mxu0 0.0
        %1055 = vmatprep.subr.mxu0 0.0
        %1056 = vmatpush1.msra.mxu0 0.0
        %1057 = vmatprep.subr.mxu0 0.0
        %1058 = vmatpush1.msra.mxu0 0.0
        %1059 = vmatprep.subr.mxu0 0.0
        %1060 = vmatpush1.msra.mxu0 0.0
        %1061 = vmatprep.subr.mxu0 0.0
        %1062 = vmatpush1.msra.mxu0 0.0
        %1063 = vmatprep.subr.mxu0 0.0
        %1064 = vmatpush1.msra.mxu0 0.0
        %1065 = vmatprep.subr.mxu0 0.0
        %1066 = vmatpush1.msra.mxu0 0.0
        %1067 = vmatprep.subr.mxu0 0.0
        %1068 = vmatpush1.msra.mxu0 0.0
        %1069 = vmatprep.subr.mxu0 0.0
        %1070 = vmatpush1.msra.mxu0 0.0
        %1071 = vmatprep.subr.mxu0 0.0
        %1072 = vmatpush1.msra.mxu0 0.0
        %1073 = vmatprep.subr.mxu0 0.0
        %1074 = vmatpush1.msra.mxu0 0.0
        %1075 = vmatprep.mubr.f32.mxu0 0.0
        %1076 = vmatmul.mubr.f32.gmra.mrb[0].mxu0 %v1000
        %v1077 = vpop.f32.mrb[0].mxu0
        %v1078 = vadd.f32 %v997, %v1077
        %v1079 = vpop.f32.mrb[0].mxu0
        %1080 = vmatprep.mubr.f32.mxu0 0.0
        %1081 = vmatmul.mubr.f32.gmra.mrb[0].mxu0 %v1003
        %v1082 = vpop.f32.mrb[0].mxu0
        %v1083 = vadd.f32 %v997, %v1082
        %v1084 = vpop.f32.mrb[0].mxu0
        %1085 = vmatprep.mubr.f32.mxu0 0.0
        %1086 = vmatmul.mubr.f32.gmra.mrb[0].mxu0 %v1006
        %v1087 = vpop.f32.mrb[0].mxu0
        %v1088 = vadd.f32 %v997, %v1087
        %v1089 = vpop.f32.mrb[0].mxu0
        %1090 = vmatprep.mubr.f32.mxu0 0.0
        %1091 = vmatmul.mubr.f32.gmra.mrb[0].mxu0 %v1009
        %v1092 = vpop.f32.mrb[0].mxu0
        %v1093 = vadd.f32 %v997, %v1092
        %v1094 = vpop.f32.mrb[0].mxu0
        %1095 = vdwg.mxu0
        %vm1096 = vcmask 31744
        %1097 = vst.msk [vmem:[%s359] sm:$0xff] %vm1096, %v1078
        %1098 = vst.msk [vmem:[%s359 + $0x8] sm:$0xff] %vm1096, %v1083
        %1099 = vst.msk [vmem:[%s359 + $0x10] sm:$0xff] %vm1096, %v1088
        %1100 = vst.msk [vmem:[%s359 + $0x18] sm:$0xff] %vm1096, %v1093
        %s1101 = smul.u32 4, %s29
        %p1102 = scmp.lt.s32.totalorder %s28, 0
        %s1103 = scalar_select %p1102, %s28, 0
        %p1104 = scmp.lt.s32.totalorder %s1101, 7
        %s1105 = scalar_select %p1104, %s1101, 7
        %s1106 = smul.addr %s1103, 8
        %s1107 = sadd.s32 %s1105, %s1106
        %s1108 = smul.addr %s1107, 8
        %s1109 = scalar_lea.vmem %s8, %s1108
        // Predicated region
        $region69: #{tpu_custom_call.1} parent=47 // pred_check
          %p1110 = pneg %p215
        $region70: #{tpu_custom_call.1} parent=47 // pred_check_branch
          %1112 = sbr.rel (%p1110) target = $region72
        $region71: #{tpu_custom_call.1} parent=47 // pred_region
          %s1113 = smul.u32 4, %s29
        $region72: #{tpu_custom_call.1} parent=47 // pred_fallthru
          _
      $region48: #{tpu_custom_call.1} parent=5 // pred_fallthru
        _
      %p1114 = scmp.le.s32.totalorder 2, %s19
      // Predicated region
      $region73: #{tpu_custom_call.1} parent=5 // pred_check
        %p1115 = pneg %p1114
      $region74: #{tpu_custom_call.1} parent=5 // pred_check_branch
        %1117 = sbr.rel (%p1115) target = $region76
      $region75: #{tpu_custom_call.1} parent=5 // pred_region
        %s1118 = ssub.s32 %s19, 2
        // Predicated region
        $region77: #{tpu_custom_call.1} parent=75 // pred_check
          %p1119 = pneg %p221
        $region78: #{tpu_custom_call.1} parent=75 // pred_check_branch
          %1121 = sbr.rel (%p1119) target = $region80
        $region79: #{tpu_custom_call.1} parent=75 // pred_region
          %s1122 = smul.u32 4, %s31
          %p1123 = scmp.lt.s32.totalorder %s30, 0
          %s1124 = scalar_select %p1123, %s30, 0
          %p1125 = scmp.lt.s32.totalorder %s1122, 7
          %s1126 = scalar_select %p1125, %s1122, 7
          %s1127 = smul.addr %s1124, 8
          %s1128 = sadd.s32 %s1126, %s1127
          %s1129 = smul.addr %s1128, 8
          %s1130 = scalar_lea.vmem %s8, %s1129
        $region80: #{tpu_custom_call.1} parent=75 // pred_fallthru
          _
      $region76: #{tpu_custom_call.1} parent=5 // pred_fallthru
        _
    $region6: #{tpu_custom_call.1} parent=1 // loop_footer
      %s23 = sadd.s32 1, %s19
    $region7: #{tpu_custom_call.1} parent=1 // loop_footer_branch
      %18 = sbr.rel target = $region3
    $region8: #{tpu_custom_call.1} parent=1 // loop_exit
      _
    %1131 = vsyncpa [#allocation8], 1
    %s1132 = scalar_lea.sflag [#allocation8], 1
    %1133 = vsyncpa %s1132, 1
    %1134 = vsyncpa [#allocation10], 1

</llo_original>
